<compile_context>
chip_gen: v5e
topology: v5e:2x2
jax: 0.10.0
libtpu: 0.0.40
codegen_flags: <defaults>
</compile_context>

<pallas_src>
import math
import functools

import jax
import jax.numpy as jnp
from jax import lax
from jax.experimental import pallas as pl
from jax.experimental.pallas import tpu as pltpu


# --------------------------- per-generation VMEM -----------------------------

def _pick_vmem_limit():
    cap = 64 * 1024 * 1024  # conservative fallback (v7x-sized)
    try:
        info = pltpu.get_tpu_info()
        cap = getattr(info, "vmem_capacity_bytes", cap) or cap
    except Exception:
        pass
    # ~100 MiB on 128 MiB parts (v5e/v6e); 48 MiB on 64 MiB v7x.
    if cap >= 128 * 1024 * 1024:
        return 100 * 1024 * 1024
    return 48 * 1024 * 1024


_VMEM_LIMIT = _pick_vmem_limit()


# ------------------------------ tiling helpers -------------------------------

def _round_up(x, m):
    return ((x + m - 1) // m) * m


def _tile_for(dim, cap, quantum):
    """Pick a tile (multiple of `quantum`, roughly balanced, <= ~cap) and the
    padded dim it divides.  Never degenerates to quantum-sized tiles for
    awkward dims: the dim is padded up instead (pad is zero-filled by the
    caller and sliced off the result)."""
    if dim <= cap:
        t = _round_up(dim, quantum)
        return t, t
    ntiles = -(-dim // cap)                       # ceil
    t = _round_up(-(-dim // ntiles), quantum)     # balanced tile
    return t, _round_up(dim, t)


def _divisor_tile(dim, cap, quantum):
    """Largest multiple of `quantum` <= cap that divides `dim`, else the full
    dim (a full-extent block is always legal)."""
    if dim <= cap:
        return dim
    t = (cap // quantum) * quantum
    while t >= quantum:
        if dim % t == 0:
            return t
        t -= quantum
    return dim


# ------------------------------- tiled linear --------------------------------

def _linear_kernel_nored(x_ref, w_ref, b_ref, o_ref):
    # Single K step: no accumulator scratch, no pl.when phases.
    acc = jnp.dot(x_ref[...], w_ref[...], preferred_element_type=jnp.float32)
    o_ref[...] = (acc + b_ref[...].astype(jnp.float32)).astype(o_ref.dtype)


def _linear_kernel(x_ref, w_ref, b_ref, o_ref, acc_ref):
    # x: (tm, tk), w: (tk, tn), b: (1, tn), o: (tm, tn); K is the last grid axis.
    @pl.when(pl.program_id(2) == 0)
    def _():
        acc_ref[...] = jnp.zeros_like(acc_ref)

    acc_ref[...] += jnp.dot(x_ref[...], w_ref[...],
                            preferred_element_type=jnp.float32)

    @pl.when(pl.program_id(2) == pl.num_programs(2) - 1)
    def _():
        o_ref[...] = (acc_ref[...] + b_ref[...].astype(jnp.float32)
                      ).astype(o_ref.dtype)


def pallas_linear(x2d, wt, b, *, tm_cap=512, tn_cap=512, tk_cap=512):
    """y = x2d @ wt + b with wt already transposed: (Din, Dout)."""
    M, Din = x2d.shape
    Din2, Dout = wt.shape
    assert Din == Din2

    tm, Mp = _tile_for(M, tm_cap, 8)       # sublane-role dim
    tk, Kp = _tile_for(Din, tk_cap, 128)   # reduction dim (zero-pad is exact)
    tn, Np = _tile_for(Dout, tn_cap, 128)  # lane-role output dim

    if Mp != M or Kp != Din:
        x2d = jnp.pad(x2d, ((0, Mp - M), (0, Kp - Din)))
    if Kp != Din or Np != Dout:
        wt = jnp.pad(wt, ((0, Kp - Din), (0, Np - Dout)))
    b2 = b.reshape(1, Dout)
    if Np != Dout:
        b2 = jnp.pad(b2, ((0, 0), (0, Np - Dout)))

    nk = Kp // tk
    if nk == 1:
        out = pl.pallas_call(
            _linear_kernel_nored,
            out_shape=jax.ShapeDtypeStruct((Mp, Np), x2d.dtype),
            grid_spec=pltpu.PrefetchScalarGridSpec(
                num_scalar_prefetch=0,
                grid=(Mp // tm, Np // tn),
                in_specs=[
                    pl.BlockSpec((tm, Kp), lambda i, j: (i, 0)),
                    pl.BlockSpec((Kp, tn), lambda i, j: (0, j)),
                    pl.BlockSpec((1, tn), lambda i, j: (0, j)),
                ],
                out_specs=pl.BlockSpec((tm, tn), lambda i, j: (i, j)),
            ),
            compiler_params=pltpu.CompilerParams(
                dimension_semantics=("parallel", "parallel"),
                vmem_limit_bytes=_VMEM_LIMIT,
            ),
        )(x2d, wt, b2)
    else:
        out = pl.pallas_call(
            _linear_kernel,
            out_shape=jax.ShapeDtypeStruct((Mp, Np), x2d.dtype),
            grid_spec=pltpu.PrefetchScalarGridSpec(
                num_scalar_prefetch=0,
                grid=(Mp // tm, Np // tn, nk),
                in_specs=[
                    pl.BlockSpec((tm, tk), lambda i, j, k: (i, k)),
                    pl.BlockSpec((tk, tn), lambda i, j, k: (k, j)),
                    pl.BlockSpec((1, tn), lambda i, j, k: (0, j)),
                ],
                out_specs=pl.BlockSpec((tm, tn), lambda i, j, k: (i, j)),
                scratch_shapes=[pltpu.VMEM((tm, tn), jnp.float32)],
            ),
            compiler_params=pltpu.CompilerParams(
                dimension_semantics=("parallel", "parallel", "arbitrary"),
                vmem_limit_bytes=_VMEM_LIMIT,
            ),
        )(x2d, wt, b2)

    if Mp != M or Np != Dout:
        out = out[:M, :Dout]
    return out


# ----------------------- flash attention (online softmax) --------------------

def _flash_attn_kernel(q_ref, k_ref, v_ref, o_ref, m_sc, l_sc, acc_sc, *, scale):
    # Grid: (B, heads, Tq-tiles, Tk-tiles); Tk is the reduction ("arbitrary") axis.
    j = pl.program_id(3)

    @pl.when(j == 0)
    def _():
        m_sc[...] = jnp.full_like(m_sc, -jnp.inf)
        l_sc[...] = jnp.zeros_like(l_sc)
        acc_sc[...] = jnp.zeros_like(acc_sc)

    q = q_ref[0]                                   # (tq, dh)
    k = k_ref[0]                                   # (tk, dh)
    v = v_ref[0]                                   # (tk, dh)

    # Contract the shared head dim directly (no k.T materialized); logits are
    # scaled by 1/sqrt(d_key) in f32, matching the PyTorch numerics.
    s = lax.dot_general(q, k, (((1,), (1,)), ((), ())),
                        preferred_element_type=jnp.float32) * scale   # (tq, tk)

    m_prev = m_sc[...]
    m_new = jnp.maximum(m_prev, jnp.max(s, axis=-1, keepdims=True))
    alpha = jnp.exp(m_prev - m_new)
    # exp / running stats stay f32 (v5e has no bf16 EUP); p is only down-cast
    # for the MXU P@V matmul.
    p = jnp.exp(s - m_new)
    l_sc[...] = alpha * l_sc[...] + jnp.sum(p, axis=-1, keepdims=True)
    acc_sc[...] = alpha * acc_sc[...] + jnp.dot(
        p.astype(v.dtype), v, preferred_element_type=jnp.float32)
    m_sc[...] = m_new

    @pl.when(j == pl.num_programs(3) - 1)
    def _():
        # Exact normalization (no approximate reciprocal).
        o_ref[0, :, :] = (acc_sc[...] / l_sc[...]).astype(o_ref.dtype)


def pallas_attention(q, k, v, *, n_heads, dh, scale,
                     q_head_off=0, k_head_off=0, v_head_off=0,
                     tq_cap=256, tk_cap=1024):
    """Multi-head attention over packed projections.

    q: (B, Tq, *), k/v: (B, Tk, *); head h of q lives at lane block
    q_head_off + h (block width dh), similarly for k/v.  Output is
    (B, Tq, n_heads * dh) with head h at lane block h."""
    B, Tq, _ = q.shape
    _, Tk, _ = k.shape

    tq, Tqp = _tile_for(Tq, tq_cap, 8)
    if Tqp != Tq:
        # Only the query is padded (padded rows are sliced off); k/v keep
        # their original extent so no spurious keys enter the softmax.
        q = jnp.pad(q, ((0, 0), (0, Tqp - Tq), (0, 0)))
    # K/V tiles must divide Tk exactly (zero-padded keys would receive
    # softmax mass).  TODO(synk): pad + mask keys for fully general Tk.
    tk = _divisor_tile(Tk, tk_cap, 8)

    grid = (B, n_heads, Tqp // tq, Tk // tk)

    out = pl.pallas_call(
        functools.partial(_flash_attn_kernel, scale=scale),
        out_shape=jax.ShapeDtypeStruct((B, Tqp, n_heads * dh), q.dtype),
        grid_spec=pltpu.PrefetchScalarGridSpec(
            num_scalar_prefetch=0,
            grid=grid,
            in_specs=[
                pl.BlockSpec((1, tq, dh),
                             lambda b, h, i, j: (b, i, q_head_off + h)),
                pl.BlockSpec((1, tk, dh),
                             lambda b, h, i, j: (b, j, k_head_off + h)),
                pl.BlockSpec((1, tk, dh),
                             lambda b, h, i, j: (b, j, v_head_off + h)),
            ],
            out_specs=pl.BlockSpec((1, tq, dh),
                                   lambda b, h, i, j: (b, i, h)),
            scratch_shapes=[
                pltpu.VMEM((tq, 1), jnp.float32),    # running max
                pltpu.VMEM((tq, 1), jnp.float32),    # running sum
                pltpu.VMEM((tq, dh), jnp.float32),   # output accumulator
            ],
        ),
        compiler_params=pltpu.CompilerParams(
            dimension_semantics=("parallel", "parallel", "parallel", "arbitrary"),
            vmem_limit_bytes=_VMEM_LIMIT,
        ),
    )(q, k, v)

    if Tqp != Tq:
        out = out[:, :Tq, :]
    return out


# ------------------------------ module forward -------------------------------

def init_multihead2_params(key, d_key, d_value):
    ks = jax.random.split(key, 8)

    def lin(kw, kb, din, dout):
        bound = 1.0 / math.sqrt(din)
        w = jax.random.uniform(kw, (dout, din), jnp.float32, -bound, bound)
        b = jax.random.uniform(kb, (dout,), jnp.float32, -bound, bound)
        # Store the transposed (Din, Dout) weight once at init so the forward
        # pass never pays a per-call HBM transpose.
        return w.T, b

    params = {}
    params["wq_wt"], params["wq_b"] = lin(ks[0], ks[1], d_key, d_key)
    params["wk_wt"], params["wk_b"] = lin(ks[2], ks[3], d_key, d_key)
    params["wv_wt"], params["wv_b"] = lin(ks[4], ks[5], d_value, d_value)
    params["wo_wt"], params["wo_b"] = lin(ks[6], ks[7], d_value, d_key)
    if d_key == d_value:
        # Pre-concatenated QKV weight for the self-attention fast path: the
        # activation is read from HBM once and one pipeline ramp is paid
        # instead of three.
        params["wqkv_wt"] = jnp.concatenate(
            [params["wq_wt"], params["wk_wt"], params["wv_wt"]], axis=1)
        params["wqkv_b"] = jnp.concatenate(
            [params["wq_b"], params["wk_b"], params["wv_b"]], axis=0)
    return params


def multihead2_forward(params, query, key, value, *, n_heads, d_key,
                       compute_dtype=jnp.bfloat16, self_attention=False):
    """MultiHead2.forward (mask=None, beta=0, tau=1, inference dropout).

    Default compute is bf16 MXU inputs + f32 accumulation/softmax stats
    (recommended on every TPU generation); compute_dtype=jnp.float32 matches
    PyTorch numerics for parity testing.  self_attention=True uses the fused
    QKV projection (query is used for key/value)."""
    if self_attention:
        key = value = query

    B, Tq, D = query.shape
    _, Tk, Dk = key.shape
    _, _, Dv = value.shape
    assert D == d_key and Dk == d_key, "query/key feature dim must equal d_key"
    assert d_key % n_heads == 0, "d_key must be divisible by n_heads"
    dh = d_key // n_heads
    assert dh % 128 == 0, (
        "head dim must be a multiple of 128 for lane-aligned head slabs "
        "(got %d)" % dh)  # TODO(synk): support smaller head dims.
    # Head splitting (as in the PyTorch module) assumes d_value == d_key.
    assert Dv == d_key, "d_value must equal d_key for the head split"

    inv_scale = 1.0 / math.sqrt(d_key)   # full d_key, as in the PyTorch module
    cast = lambda a: a.astype(compute_dtype)

    if self_attention and "wqkv_wt" in params:
        # One fused projection -> packed (B, Tq, 3*D); the attention kernel
        # reads Q/K/V straight out of the packed layout via head offsets.
        qkv = pallas_linear(cast(query).reshape(-1, D),
                            cast(params["wqkv_wt"]),
                            params["wqkv_b"]).reshape(B, Tq, 3 * D)
        attn = pallas_attention(qkv, qkv, qkv, n_heads=n_heads, dh=dh,
                                scale=inv_scale,
                                k_head_off=n_heads, v_head_off=2 * n_heads)
    else:
        q = pallas_linear(cast(query).reshape(-1, D), cast(params["wq_wt"]),
                          params["wq_b"]).reshape(B, Tq, D)
        k = pallas_linear(cast(key).reshape(-1, Dk), cast(params["wk_wt"]),
                          params["wk_b"]).reshape(B, Tk, Dk)
        v = pallas_linear(cast(value).reshape(-1, Dv), cast(params["wv_wt"]),
                          params["wv_b"]).reshape(B, Tk, Dv)
        attn = pallas_attention(q, k, v, n_heads=n_heads, dh=dh,
                                scale=inv_scale)

    out = pallas_linear(attn.reshape(-1, Dv), cast(params["wo_wt"]),
                        params["wo_b"]).reshape(B, Tq, d_key)
    return out.astype(jnp.float32)


# -------------------------- pure-JAX reference check -------------------------

def _reference_forward(params, query, key, value, *, n_heads, d_key):
    B, Tq, D = query.shape
    _, Tk, _ = key.shape
    N, dh = n_heads, D // n_heads
    lin = lambda x, wt, b: x @ wt + b
    q = lin(query, params["wq_wt"], params["wq_b"])
    k = lin(key, params["wk_wt"], params["wk_b"])
    v = lin(value, params["wv_wt"], params["wv_b"])
    sh = lambda x, T: x.reshape(B, T, N, dh).transpose(0, 2, 1, 3).reshape(B * N, T, dh)
    qh, kh, vh = sh(q, Tq), sh(k, Tk), sh(v, Tk)
    s = jnp.einsum("bqd,bkd->bqk", qh, kh) / math.sqrt(d_key)
    p = jax.nn.softmax(s, axis=-1)
    o = jnp.einsum("bqk,bkd->bqd", p, vh)
    o = o.reshape(B, N, Tq, dh).transpose(0, 2, 1, 3).reshape(B, Tq, D)
    return lin(o, params["wo_wt"], params["wo_b"])


if __name__ == "__main__":
    # Small but representative: d_key = d_value = 512, 4 heads (head dim 128).
    B, Tq, Tk, D, N = 2, 16, 16, 512, 4

    root = jax.random.PRNGKey(0)
    kp, kq, kk, kv = jax.random.split(root, 4)

    params = init_multihead2_params(kp, d_key=D, d_value=D)
    query = jax.random.normal(kq, (B, Tq, D), jnp.float32)
    key = jax.random.normal(kk, (B, Tk, D), jnp.float32)
    value = jax.random.normal(kv, (B, Tk, D), jnp.float32)

    ref = _reference_forward(params, query, key, value, n_heads=N, d_key=D)

    # 1) f32 path: parity with the PyTorch-equivalent reference.
    fwd_f32 = jax.jit(functools.partial(multihead2_forward, n_heads=N, d_key=D,
                                        compute_dtype=jnp.float32))
    out_f32 = jax.block_until_ready(fwd_f32(params, query, key, value))
    assert out_f32.shape == (B, Tq, D)
    assert jnp.allclose(out_f32, ref, atol=2e-3, rtol=2e-3), \
        "f32 mismatch vs reference"

    # 2) bf16 default path (bf16 MXU inputs, f32 accumulation / softmax stats).
    fwd_bf16 = jax.jit(functools.partial(multihead2_forward, n_heads=N, d_key=D))
    out_bf16 = jax.block_until_ready(fwd_bf16(params, query, key, value))
    rel = jnp.linalg.norm(out_bf16 - ref) / jnp.linalg.norm(ref)
    assert rel < 5e-2, "bf16 relative error too large: %s" % rel

    # 3) fused-QKV self-attention fast path.
    fwd_self = jax.jit(functools.partial(multihead2_forward, n_heads=N, d_key=D,
                                         self_attention=True))
    out_self = jax.block_until_ready(fwd_self(params, query, query, query))
    ref_self = _reference_forward(params, query, query, query,
                                  n_heads=N, d_key=D)
    rel_self = jnp.linalg.norm(out_self - ref_self) / jnp.linalg.norm(ref_self)
    assert rel_self < 5e-2, "fused QKV relative error too large: %s" % rel_self

    print("KERNEL_OK")
</pallas_src>

<mosaic_0001>
module attributes {stable_mosaic.version = 11 : i64} {
  func.func @_flash_attn_kernel(%arg0: i32, %arg1: i32, %arg2: i32, %arg3: i32, %arg4: memref<1x16x128xf32, #tpu.memory_space<vmem>>, %arg5: memref<1x16x128xf32, #tpu.memory_space<vmem>>, %arg6: memref<1x16x128xf32, #tpu.memory_space<vmem>>, %arg7: memref<1x16x128xf32, #tpu.memory_space<vmem>>, %arg8: memref<16x1xf32, #tpu.memory_space<vmem>>, %arg9: memref<16x1xf32, #tpu.memory_space<vmem>>, %arg10: memref<16x128xf32, #tpu.memory_space<vmem>>) attributes {dimension_semantics = [#tpu.dimension_semantics<parallel>, #tpu.dimension_semantics<parallel>, #tpu.dimension_semantics<parallel>, #tpu.dimension_semantics<arbitrary>], iteration_bounds = array<i64: 2, 4, 1, 1>, scalar_prefetch = 0 : i64, scratch_operands = 3 : i64, tpu.core_type = #tpu.core_type<tc>, window_params = [{transform_indices = @transform_0, window_bounds = array<i64: 1, 16, 128>}, {transform_indices = @transform_1, window_bounds = array<i64: 1, 16, 128>}, {transform_indices = @transform_2, window_bounds = array<i64: 1, 16, 128>}, {transform_indices = @transform_3, window_bounds = array<i64: 1, 16, 128>}]} {
    %c0_i32 = arith.constant 0 : i32
    %0 = arith.cmpi eq, %arg3, %c0_i32 : i32
    %1 = arith.extui %0 : i1 to i32
    %c0_i32_0 = arith.constant 0 : i32
    %2 = arith.cmpi ne, %1, %c0_i32_0 : i32
    scf.if %2 {
      %cst_27 = arith.constant 0xFF800000 : f32
      %37 = vector.broadcast %cst_27 : f32 to vector<16x1xf32>
      %c0_28 = arith.constant 0 : index
      %c0_29 = arith.constant 0 : index
      %38 = vector.load %arg8[%c0_28, %c0_29] : memref<16x1xf32, #tpu.memory_space<vmem>>, vector<16x1xf32>
      tpu.vector_store %arg8[%c0_28, %c0_29], %37 {strides = array<i32>} : memref<16x1xf32, #tpu.memory_space<vmem>>, vector<16x1xf32>,
      %cst_30 = arith.constant 0.000000e+00 : f32
      %39 = vector.broadcast %cst_30 : f32 to vector<16x1xf32>
      %c0_31 = arith.constant 0 : index
      %c0_32 = arith.constant 0 : index
      %40 = vector.load %arg9[%c0_31, %c0_32] : memref<16x1xf32, #tpu.memory_space<vmem>>, vector<16x1xf32>
      tpu.vector_store %arg9[%c0_31, %c0_32], %39 {strides = array<i32>} : memref<16x1xf32, #tpu.memory_space<vmem>>, vector<16x1xf32>,
      %cst_33 = arith.constant 0.000000e+00 : f32
      %41 = vector.broadcast %cst_33 : f32 to vector<16x128xf32>
      %c0_34 = arith.constant 0 : index
      %c0_35 = arith.constant 0 : index
      %42 = vector.load %arg10[%c0_34, %c0_35] : memref<16x128xf32, #tpu.memory_space<vmem>>, vector<16x128xf32>
      tpu.vector_store %arg10[%c0_34, %c0_35], %41 {strides = array<i32>} : memref<16x128xf32, #tpu.memory_space<vmem>>, vector<16x128xf32>,
    } else {
    }
    %c0 = arith.constant 0 : index
    %c0_1 = arith.constant 0 : index
    %c0_2 = arith.constant 0 : index
    %3 = vector.load %arg4[%c0, %c0_1, %c0_2] : memref<1x16x128xf32, #tpu.memory_space<vmem>>, vector<1x16x128xf32>
    %4 = vector.shape_cast %3 : vector<1x16x128xf32> to vector<16x128xf32>
    %c0_3 = arith.constant 0 : index
    %c0_4 = arith.constant 0 : index
    %c0_5 = arith.constant 0 : index
    %5 = vector.load %arg5[%c0_3, %c0_4, %c0_5] : memref<1x16x128xf32, #tpu.memory_space<vmem>>, vector<1x16x128xf32>
    %6 = vector.shape_cast %5 : vector<1x16x128xf32> to vector<16x128xf32>
    %c0_6 = arith.constant 0 : index
    %c0_7 = arith.constant 0 : index
    %c0_8 = arith.constant 0 : index
    %7 = vector.load %arg6[%c0_6, %c0_7, %c0_8] : memref<1x16x128xf32, #tpu.memory_space<vmem>>, vector<1x16x128xf32>
    %8 = vector.shape_cast %7 : vector<1x16x128xf32> to vector<16x128xf32>
    %cst = arith.constant dense<0.000000e+00> : vector<16x16xf32>
    %9 = tpu.matmul %4, %6, %cst {dimension_numbers = #tpu.dot_dimension_numbers<[1], [1], [0], [0], [0, 0, 1, 0], [], []>} : vector<16x128xf32>, vector<16x128xf32>, vector<16x16xf32> -> vector<16x16xf32>
    %cst_9 = arith.constant 0.0441941731 : f32
    %10 = vector.broadcast %cst_9 : f32 to vector<16x16xf32>
    %11 = arith.mulf %9, %10 : vector<16x16xf32>
    %c0_10 = arith.constant 0 : index
    %c0_11 = arith.constant 0 : index
    %12 = vector.load %arg8[%c0_10, %c0_11] : memref<16x1xf32, #tpu.memory_space<vmem>>, vector<16x1xf32>
    %cst_12 = arith.constant dense<0xFF800000> : vector<16xf32>
    %13 = vector.multi_reduction <maximumf>, %11, %cst_12 [1] : vector<16x16xf32> to vector<16xf32>
    %14 = vector.shape_cast %13 : vector<16xf32> to vector<16x1xf32>
    %15 = arith.maximumf %12, %14 : vector<16x1xf32>
    %16 = arith.subf %12, %15 : vector<16x1xf32>
    %17 = math.exp %16 : vector<16x1xf32>
    %18 = vector.broadcast %15 : vector<16x1xf32> to vector<16x16xf32>
    %19 = arith.subf %11, %18 : vector<16x16xf32>
    %20 = math.exp %19 : vector<16x16xf32>
    %c0_13 = arith.constant 0 : index
    %c0_14 = arith.constant 0 : index
    %21 = vector.load %arg9[%c0_13, %c0_14] : memref<16x1xf32, #tpu.memory_space<vmem>>, vector<16x1xf32>
    %22 = arith.mulf %17, %21 : vector<16x1xf32>
    %cst_15 = arith.constant dense<0.000000e+00> : vector<16xf32>
    %23 = vector.multi_reduction <add>, %20, %cst_15 [1] : vector<16x16xf32> to vector<16xf32>
    %24 = vector.shape_cast %23 : vector<16xf32> to vector<16x1xf32>
    %25 = arith.addf %22, %24 : vector<16x1xf32>
    %c0_16 = arith.constant 0 : index
    %c0_17 = arith.constant 0 : index
    %26 = vector.load %arg9[%c0_16, %c0_17] : memref<16x1xf32, #tpu.memory_space<vmem>>, vector<16x1xf32>
    tpu.vector_store %arg9[%c0_16, %c0_17], %25 {strides = array<i32>} : memref<16x1xf32, #tpu.memory_space<vmem>>, vector<16x1xf32>,
    %c0_18 = arith.constant 0 : index
    %c0_19 = arith.constant 0 : index
    %27 = vector.load %arg10[%c0_18, %c0_19] : memref<16x128xf32, #tpu.memory_space<vmem>>, vector<16x128xf32>
    %28 = vector.broadcast %17 : vector<16x1xf32> to vector<16x128xf32>
    %29 = arith.mulf %28, %27 : vector<16x128xf32>
    %cst_20 = arith.constant dense<0.000000e+00> : vector<16x128xf32>
    %30 = tpu.matmul %20, %8, %cst_20 {dimension_numbers = #tpu.dot_dimension_numbers<[1], [0], [0], [1], [0, 0, 1, 1], [], []>} : vector<16x16xf32>, vector<16x128xf32>, vector<16x128xf32> -> vector<16x128xf32>
    %31 = arith.addf %29, %30 : vector<16x128xf32>
    %c0_21 = arith.constant 0 : index
    %c0_22 = arith.constant 0 : index
    %32 = vector.load %arg10[%c0_21, %c0_22] : memref<16x128xf32, #tpu.memory_space<vmem>>, vector<16x128xf32>
    tpu.vector_store %arg10[%c0_21, %c0_22], %31 {strides = array<i32>} : memref<16x128xf32, #tpu.memory_space<vmem>>, vector<16x128xf32>,
    %c0_23 = arith.constant 0 : index
    %c0_24 = arith.constant 0 : index
    %33 = vector.load %arg8[%c0_23, %c0_24] : memref<16x1xf32, #tpu.memory_space<vmem>>, vector<16x1xf32>
    tpu.vector_store %arg8[%c0_23, %c0_24], %15 {strides = array<i32>} : memref<16x1xf32, #tpu.memory_space<vmem>>, vector<16x1xf32>,
    %c0_i32_25 = arith.constant 0 : i32
    %34 = arith.cmpi eq, %arg3, %c0_i32_25 : i32
    %35 = arith.extui %34 : i1 to i32
    %c0_i32_26 = arith.constant 0 : i32
    %36 = arith.cmpi ne, %35, %c0_i32_26 : i32
    scf.if %36 {
      %c0_27 = arith.constant 0 : index
      %c0_28 = arith.constant 0 : index
      %37 = vector.load %arg10[%c0_27, %c0_28] : memref<16x128xf32, #tpu.memory_space<vmem>>, vector<16x128xf32>
      %c0_29 = arith.constant 0 : index
      %c0_30 = arith.constant 0 : index
      %38 = vector.load %arg9[%c0_29, %c0_30] : memref<16x1xf32, #tpu.memory_space<vmem>>, vector<16x1xf32>
      %39 = vector.broadcast %38 : vector<16x1xf32> to vector<16x128xf32>
      %40 = arith.divf %37, %39 : vector<16x128xf32>
      %c0_31 = arith.constant 0 : index
      %c0_32 = arith.constant 0 : index
      %c0_33 = arith.constant 0 : index
      %41 = vector.load %arg7[%c0_31, %c0_32, %c0_33] : memref<1x16x128xf32, #tpu.memory_space<vmem>>, vector<1x16x128xf32>
      %42 = vector.shape_cast %41 : vector<1x16x128xf32> to vector<16x128xf32>
      %43 = vector.shape_cast %40 : vector<16x128xf32> to vector<1x16x128xf32>
      tpu.vector_store %arg7[%c0_31, %c0_32, %c0_33], %43 {strides = array<i32>} : memref<1x16x128xf32, #tpu.memory_space<vmem>>, vector<1x16x128xf32>,
    } else {
    }
    return
  }
  func.func @transform_0(%arg0: i32, %arg1: i32, %arg2: i32, %arg3: i32) -> (i32, i32, i32) {
    %c0_i32 = arith.constant 0 : i32
    %0 = arith.addi %c0_i32, %arg1 : i32
    %c0_i32_0 = arith.constant 0 : i32
    return %arg0, %arg2, %0 : i32, i32, i32
  }
  func.func @transform_1(%arg0: i32, %arg1: i32, %arg2: i32, %arg3: i32) -> (i32, i32, i32) {
    %c0_i32 = arith.constant 0 : i32
    %0 = arith.addi %c0_i32, %arg1 : i32
    %c0_i32_0 = arith.constant 0 : i32
    return %arg0, %arg3, %0 : i32, i32, i32
  }
  func.func @transform_2(%arg0: i32, %arg1: i32, %arg2: i32, %arg3: i32) -> (i32, i32, i32) {
    %c0_i32 = arith.constant 0 : i32
    %0 = arith.addi %c0_i32, %arg1 : i32
    %c0_i32_0 = arith.constant 0 : i32
    return %arg0, %arg3, %0 : i32, i32, i32
  }
  func.func @transform_3(%arg0: i32, %arg1: i32, %arg2: i32, %arg3: i32) -> (i32, i32, i32) {
    %c0_i32 = arith.constant 0 : i32
    return %arg0, %arg2, %arg1 : i32, i32, i32
  }
}

module attributes {stable_mosaic.version = 11 : i64} {
  func.func @_linear_kernel_nored(%arg0: i32, %arg1: i32, %arg2: memref<32x512xf32, #tpu.memory_space<vmem>>, %arg3: memref<512x512xf32, #tpu.memory_space<vmem>>, %arg4: memref<1x512xf32, #tpu.memory_space<vmem>>, %arg5: memref<32x512xf32, #tpu.memory_space<vmem>>) attributes {dimension_semantics = [#tpu.dimension_semantics<parallel>, #tpu.dimension_semantics<parallel>], iteration_bounds = array<i64: 1, 1>, scalar_prefetch = 0 : i64, scratch_operands = 0 : i64, tpu.core_type = #tpu.core_type<tc>, window_params = [{transform_indices = @transform_0, window_bounds = array<i64: 32, 512>}, {transform_indices = @transform_1, window_bounds = array<i64: 512, 512>}, {transform_indices = @transform_2, window_bounds = array<i64: 1, 512>}, {transform_indices = @transform_3, window_bounds = array<i64: 32, 512>}]} {
    %c0 = arith.constant 0 : index
    %c0_0 = arith.constant 0 : index
    %0 = vector.load %arg2[%c0, %c0_0] : memref<32x512xf32, #tpu.memory_space<vmem>>, vector<32x512xf32>
    %c0_1 = arith.constant 0 : index
    %c0_2 = arith.constant 0 : index
    %1 = vector.load %arg3[%c0_1, %c0_2] : memref<512x512xf32, #tpu.memory_space<vmem>>, vector<512x512xf32>
    %cst = arith.constant dense<0.000000e+00> : vector<32x512xf32>
    %2 = tpu.matmul %0, %1, %cst {dimension_numbers = #tpu.dot_dimension_numbers<[1], [0], [0], [1], [0, 0, 1, 1], [], []>} : vector<32x512xf32>, vector<512x512xf32>, vector<32x512xf32> -> vector<32x512xf32>
    %c0_3 = arith.constant 0 : index
    %c0_4 = arith.constant 0 : index
    %3 = vector.load %arg4[%c0_3, %c0_4] : memref<1x512xf32, #tpu.memory_space<vmem>>, vector<1x512xf32>
    %4 = vector.broadcast %3 : vector<1x512xf32> to vector<32x512xf32>
    %5 = arith.addf %2, %4 : vector<32x512xf32>
    %c0_5 = arith.constant 0 : index
    %c0_6 = arith.constant 0 : index
    %6 = vector.load %arg5[%c0_5, %c0_6] : memref<32x512xf32, #tpu.memory_space<vmem>>, vector<32x512xf32>
    tpu.vector_store %arg5[%c0_5, %c0_6], %5 {strides = array<i32>} : memref<32x512xf32, #tpu.memory_space<vmem>>, vector<32x512xf32>,
    return
  }
  func.func @transform_0(%arg0: i32, %arg1: i32) -> (i32, i32) {
    %c0_i32 = arith.constant 0 : i32
    %c0_i32_0 = arith.constant 0 : i32
    return %arg0, %c0_i32 : i32, i32
  }
  func.func @transform_1(%arg0: i32, %arg1: i32) -> (i32, i32) {
    %c0_i32 = arith.constant 0 : i32
    %c0_i32_0 = arith.constant 0 : i32
    return %c0_i32, %arg1 : i32, i32
  }
  func.func @transform_2(%arg0: i32, %arg1: i32) -> (i32, i32) {
    %c0_i32 = arith.constant 0 : i32
    %c0_i32_0 = arith.constant 0 : i32
    return %c0_i32, %arg1 : i32, i32
  }
  func.func @transform_3(%arg0: i32, %arg1: i32) -> (i32, i32) {
    %c0_i32 = arith.constant 0 : i32
    return %arg0, %arg1 : i32, i32
  }
}

module attributes {stable_mosaic.version = 11 : i64} {
  func.func @_linear_kernel_nored(%arg0: i32, %arg1: i32, %arg2: memref<32x512xf32, #tpu.memory_space<vmem>>, %arg3: memref<512x512xf32, #tpu.memory_space<vmem>>, %arg4: memref<1x512xf32, #tpu.memory_space<vmem>>, %arg5: memref<32x512xf32, #tpu.memory_space<vmem>>) attributes {dimension_semantics = [#tpu.dimension_semantics<parallel>, #tpu.dimension_semantics<parallel>], iteration_bounds = array<i64: 1, 1>, scalar_prefetch = 0 : i64, scratch_operands = 0 : i64, tpu.core_type = #tpu.core_type<tc>, window_params = [{transform_indices = @transform_0, window_bounds = array<i64: 32, 512>}, {transform_indices = @transform_1, window_bounds = array<i64: 512, 512>}, {transform_indices = @transform_2, window_bounds = array<i64: 1, 512>}, {transform_indices = @transform_3, window_bounds = array<i64: 32, 512>}]} {
    %c0 = arith.constant 0 : index
    %c0_0 = arith.constant 0 : index
    %0 = vector.load %arg2[%c0, %c0_0] : memref<32x512xf32, #tpu.memory_space<vmem>>, vector<32x512xf32>
    %c0_1 = arith.constant 0 : index
    %c0_2 = arith.constant 0 : index
    %1 = vector.load %arg3[%c0_1, %c0_2] : memref<512x512xf32, #tpu.memory_space<vmem>>, vector<512x512xf32>
    %cst = arith.constant dense<0.000000e+00> : vector<32x512xf32>
    %2 = tpu.matmul %0, %1, %cst {dimension_numbers = #tpu.dot_dimension_numbers<[1], [0], [0], [1], [0, 0, 1, 1], [], []>} : vector<32x512xf32>, vector<512x512xf32>, vector<32x512xf32> -> vector<32x512xf32>
    %c0_3 = arith.constant 0 : index
    %c0_4 = arith.constant 0 : index
    %3 = vector.load %arg4[%c0_3, %c0_4] : memref<1x512xf32, #tpu.memory_space<vmem>>, vector<1x512xf32>
    %4 = vector.broadcast %3 : vector<1x512xf32> to vector<32x512xf32>
    %5 = arith.addf %2, %4 : vector<32x512xf32>
    %c0_5 = arith.constant 0 : index
    %c0_6 = arith.constant 0 : index
    %6 = vector.load %arg5[%c0_5, %c0_6] : memref<32x512xf32, #tpu.memory_space<vmem>>, vector<32x512xf32>
    tpu.vector_store %arg5[%c0_5, %c0_6], %5 {strides = array<i32>} : memref<32x512xf32, #tpu.memory_space<vmem>>, vector<32x512xf32>,
    return
  }
  func.func @transform_0(%arg0: i32, %arg1: i32) -> (i32, i32) {
    %c0_i32 = arith.constant 0 : i32
    %c0_i32_0 = arith.constant 0 : i32
    return %arg0, %c0_i32 : i32, i32
  }
  func.func @transform_1(%arg0: i32, %arg1: i32) -> (i32, i32) {
    %c0_i32 = arith.constant 0 : i32
    %c0_i32_0 = arith.constant 0 : i32
    return %c0_i32, %arg1 : i32, i32
  }
  func.func @transform_2(%arg0: i32, %arg1: i32) -> (i32, i32) {
    %c0_i32 = arith.constant 0 : i32
    %c0_i32_0 = arith.constant 0 : i32
    return %c0_i32, %arg1 : i32, i32
  }
  func.func @transform_3(%arg0: i32, %arg1: i32) -> (i32, i32) {
    %c0_i32 = arith.constant 0 : i32
    return %arg0, %arg1 : i32, i32
  }
}

</mosaic_0001>

<llo_original>
// kernel: multihead2_forward.8
$region0: #{multihead2_forward.8}
  #allocation0 [shape = 'u32[]', space=smem, size = 0x4, offset = 0x4, fixed_abs, tag = 'smem constant byte address 0x4 - core index']
  #allocation1 [shape = 'u32[72,128]{1,0:T(1,128)}', space=vmem, size = 0x9000, scoped, tag = 'internal scratch']
  #allocation2 [shape = 'f32[16,1]{1,0:T(8,128)}', space=vmem, size = 0x2000, scoped, tag = 'scratch operand']
  #allocation3 [shape = 'f32[16,1]{1,0:T(8,128)}', space=vmem, size = 0x2000, scoped, tag = 'scratch operand']
  #allocation4 [shape = 'f32[16,128]{1,0:T(8,128)}', space=vmem, size = 0x2000, scoped, tag = 'scratch operand']
  %s0 = inlined_call_operand.vmem [shape: f32[2,16,512], index: 0, kind: input, shape index: {}]
  %s1 = inlined_call_operand.vmem [shape: f32[2,16,512], index: 1, kind: input, shape index: {}]
  %s2 = inlined_call_operand.vmem [shape: f32[2,16,512], index: 2, kind: input, shape index: {}]
  %s3 = inlined_call_operand.vmem [shape: f32[2,16,512], index: 3, kind: output, shape index: {}]
  %s4 = sld [smem:[#allocation0]]
  $region201: #{multihead2_forward.8} parent=0
    _
  %s6 = ssub.s32 1, %s4
  %s7 = scalar_select 0, %s6, %s4
  $region1: #{multihead2_forward.8} parent=0
    #allocation5 [shape = 'u8[16384]{0}', space=vmem, size = 0x4000, scoped, tag = 'input window, operand 0']
    #allocation6 [shape = 'u8[16384]{0}', space=vmem, size = 0x4000, scoped, tag = 'input window, operand 1']
    #allocation7 [shape = 'u8[16384]{0}', space=vmem, size = 0x4000, scoped, tag = 'input window, operand 2']
    #allocation8 [shape = 'u8[16384]{0}', space=vmem, size = 0x4000, scoped, tag = 'output window, operand 0']
    loop: start=0, step=1, limit=10
    $region2: #{multihead2_forward.8} parent=1 // loop_pre_header
      _
    $region3: #{multihead2_forward.8} parent=1 // loop_header
      %s9 = sphi 0, %s13
      %p10 = scmp.ge.s32.totalorder %s9, 10
      %s16 = sphi 0, %s42
      %s17 = sphi 0, %s38
      %s18 = sphi 0, %s34
      %s19 = sphi 0, %s30
      %s20 = sphi 0, %s16
      %s21 = sphi 0, %s17
      %s22 = sphi 0, %s18
      %s23 = sphi 0, %s19
      %s24 = sphi 0, %s20
      %s25 = sphi 0, %s21
      %s26 = sphi 0, %s22
      %s27 = sphi 0, %s23
      %s49 = sphi 0, %s51
      %s52 = sphi 0, %s49
      %s53 = sphi 0, %s52
      %s69 = sphi 0, %s53
      %s79 = sphi 0, %s81
      %s82 = sphi 0, %s79
      %s83 = sphi 0, %s82
      %s99 = sphi 0, %s83
      %s109 = sphi 0, %s111
      %s112 = sphi 0, %s109
      %s113 = sphi 0, %s112
      %s129 = sphi 0, %s113
      %s139 = sphi 0, %s141
      %s142 = sphi 0, %s139
      %s143 = sphi 0, %s142
      %s159 = sphi 0, %s143
    $region4: #{multihead2_forward.8} parent=1 // loop_header_branch
      %12 = sbr.rel (%p10) target = $region8
    $region5: #{multihead2_forward.8} parent=1 // loop_body
      %s14 = ssub.s32 %s9, 1
      %s15 = ssub.s32 %s9, 2
      %s28 = sadd.s32 1, %s19
      %p29 = scmp.ge.s32.totalorder %s28, 1
      %s30 = scalar_select %p29, 0, %s28
      %s31 = sadd.s32 1, %s18
      %s32 = scalar_select %p29, %s31, %s18
      %p33 = scmp.ge.s32.totalorder %s32, 1
      %s34 = scalar_select %p33, 0, %s32
      %s35 = sadd.s32 1, %s17
      %s36 = scalar_select %p33, %s35, %s17
      %p37 = scmp.ge.s32.totalorder %s36, 4
      %s38 = scalar_select %p37, 0, %s36
      %s39 = sadd.s32 1, %s16
      %s40 = scalar_select %p37, %s39, %s16
      %p41 = scmp.ge.s32.totalorder %s40, 2
      %s42 = scalar_select %p41, 0, %s40
      %s43 = ssub.s32 %s16, %s42
      %s44 = ssub.s32 %s18, %s34
      %s45 = sor.u32 %s43, %s44
      %s46 = ssub.s32 %s17, %s38
      %s47 = sor.u32 %s45, %s46
      %p48 = scmp.eq.s32.totalorder %s47, 0
      %s50 = sadd.s32 %s49, 1
      %s51 = scalar_select %p48, %s49, %s50
      %p54 = pneg %p48
      %p55 = scmp.eq.s32.totalorder %s9, 7
      %p56 = por %p54, %p55
      %p57 = scmp.ne.s32.totalorder %s49, %s52
      %p58 = scmp.eq.s32.totalorder %s9, 0
      %p59 = por %p57, %p58
      %p60 = scmp.ne.s32.totalorder %s49, %s52
      %p61 = scmp.eq.s32.totalorder %s14, 7
      %p62 = por %p60, %p61
      %p63 = scmp.ne.s32.totalorder %s52, %s53
      %p64 = scmp.eq.s32.totalorder %s14, 0
      %p65 = por %p63, %p64
      %p66 = scmp.ne.s32.totalorder %s52, %s53
      %p67 = scmp.eq.s32.totalorder %s15, 7
      %p68 = por %p66, %p67
      %p70 = scmp.ne.s32.totalorder %s53, %s69
      %p71 = scmp.eq.s32.totalorder %s15, 0
      %p72 = por %p70, %p71
      %s73 = ssub.s32 %s16, %s42
      %s74 = ssub.s32 %s19, %s30
      %s75 = sor.u32 %s73, %s74
      %s76 = ssub.s32 %s17, %s38
      %s77 = sor.u32 %s75, %s76
      %p78 = scmp.eq.s32.totalorder %s77, 0
      %s80 = sadd.s32 %s79, 1
      %s81 = scalar_select %p78, %s79, %s80
      %p84 = pneg %p78
      %p85 = scmp.eq.s32.totalorder %s9, 7
      %p86 = por %p84, %p85
      %p87 = scmp.ne.s32.totalorder %s79, %s82
      %p88 = scmp.eq.s32.totalorder %s9, 0
      %p89 = por %p87, %p88
      %p90 = scmp.ne.s32.totalorder %s79, %s82
      %p91 = scmp.eq.s32.totalorder %s14, 7
      %p92 = por %p90, %p91
      %p93 = scmp.ne.s32.totalorder %s82, %s83
      %p94 = scmp.eq.s32.totalorder %s14, 0
      %p95 = por %p93, %p94
      %p96 = scmp.ne.s32.totalorder %s82, %s83
      %p97 = scmp.eq.s32.totalorder %s15, 7
      %p98 = por %p96, %p97
      %p100 = scmp.ne.s32.totalorder %s83, %s99
      %p101 = scmp.eq.s32.totalorder %s15, 0
      %p102 = por %p100, %p101
      %s103 = ssub.s32 %s16, %s42
      %s104 = ssub.s32 %s19, %s30
      %s105 = sor.u32 %s103, %s104
      %s106 = ssub.s32 %s17, %s38
      %s107 = sor.u32 %s105, %s106
      %p108 = scmp.eq.s32.totalorder %s107, 0
      %s110 = sadd.s32 %s109, 1
      %s111 = scalar_select %p108, %s109, %s110
      %p114 = pneg %p108
      %p115 = scmp.eq.s32.totalorder %s9, 7
      %p116 = por %p114, %p115
      %p117 = scmp.ne.s32.totalorder %s109, %s112
      %p118 = scmp.eq.s32.totalorder %s9, 0
      %p119 = por %p117, %p118
      %p120 = scmp.ne.s32.totalorder %s109, %s112
      %p121 = scmp.eq.s32.totalorder %s14, 7
      %p122 = por %p120, %p121
      %p123 = scmp.ne.s32.totalorder %s112, %s113
      %p124 = scmp.eq.s32.totalorder %s14, 0
      %p125 = por %p123, %p124
      %p126 = scmp.ne.s32.totalorder %s112, %s113
      %p127 = scmp.eq.s32.totalorder %s15, 7
      %p128 = por %p126, %p127
      %p130 = scmp.ne.s32.totalorder %s113, %s129
      %p131 = scmp.eq.s32.totalorder %s15, 0
      %p132 = por %p130, %p131
      %s133 = ssub.s32 %s16, %s42
      %s134 = ssub.s32 %s18, %s34
      %s135 = sor.u32 %s133, %s134
      %s136 = ssub.s32 %s17, %s38
      %s137 = sor.u32 %s135, %s136
      %p138 = scmp.eq.s32.totalorder %s137, 0
      %s140 = sadd.s32 %s139, 1
      %s141 = scalar_select %p138, %s139, %s140
      %p144 = pneg %p138
      %p145 = scmp.eq.s32.totalorder %s9, 7
      %p146 = por %p144, %p145
      %p147 = scmp.ne.s32.totalorder %s139, %s142
      %p148 = scmp.eq.s32.totalorder %s9, 0
      %p149 = por %p147, %p148
      %p150 = scmp.ne.s32.totalorder %s139, %s142
      %p151 = scmp.eq.s32.totalorder %s14, 7
      %p152 = por %p150, %p151
      %p153 = scmp.ne.s32.totalorder %s142, %s143
      %p154 = scmp.eq.s32.totalorder %s14, 0
      %p155 = por %p153, %p154
      %p156 = scmp.ne.s32.totalorder %s142, %s143
      %p157 = scmp.eq.s32.totalorder %s15, 7
      %p158 = por %p156, %p157
      %p160 = scmp.ne.s32.totalorder %s143, %s159
      %p161 = scmp.eq.s32.totalorder %s15, 0
      %p162 = por %p160, %p161
      %p163 = scmp.le.s32.totalorder 1, %s9
      %p164 = scmp.lt.s32.totalorder %s9, 9
      %p165 = pnand %p163, %p164
      %p166 = pneg %p165
      // Predicated region
      $region9: #{multihead2_forward.8} parent=5 // pred_check
        _
      $region10: #{multihead2_forward.8} parent=5 // pred_check_branch
        %168 = sbr.rel (%p165) target = $region12
      $region11: #{multihead2_forward.8} parent=5 // pred_region
        %s169 = ssub.s32 %s9, 1
      $region12: #{multihead2_forward.8} parent=5 // pred_fallthru
        _
      %p170 = scmp.lt.s32.totalorder %s9, 8
      // Predicated region
      $region13: #{multihead2_forward.8} parent=5 // pred_check
        %p171 = pneg %p170
      $region14: #{multihead2_forward.8} parent=5 // pred_check_branch
        %173 = sbr.rel (%p171) target = $region16
      $region15: #{multihead2_forward.8} parent=5 // pred_region
        // Predicated region
        $region17: #{multihead2_forward.8} parent=15 // pred_check
          %p174 = pneg %p59
        $region18: #{multihead2_forward.8} parent=15 // pred_check_branch
          %176 = sbr.rel (%p174) target = $region20
        $region19: #{multihead2_forward.8} parent=15 // pred_region
          %s177 = sand.u32 %s49, 1
          %s178 = sand.u32 %s49, 1
          %s179 = smul.addr %s178, 16
          %s180 = scalar_lea.vmem [#allocation5], %s179
          %s181 = smul.u32 2, %s18
          %s182 = smul.addr %s181, 4
          %s183 = sadd.s32 %s17, %s182
          %s184 = smul.addr %s16, 8
          %s185 = sadd.s32 %s183, %s184
          %s186 = smul.addr %s185, 8
          %s187 = scalar_lea.vmem %s0, %s186
          // Predicated region
          $region21: #{multihead2_forward.8} parent=19 // pred_check
            _
          $region22: #{multihead2_forward.8} parent=19 // pred_check_branch
            %189 = sbr.rel (0) target = $region24
          $region23: #{multihead2_forward.8} parent=19 // pred_region
            // Predicated region
            $region25: #{multihead2_forward.8} parent=23 // pred_check
              _
            $region26: #{multihead2_forward.8} parent=23 // pred_check_branch
              %191 = sbr.rel (0) target = $region28
            $region27: #{multihead2_forward.8} parent=23 // pred_region
              // Predicated region
              $region40: #{multihead2_forward.8} parent=27 // pred_check
                _
              $region41: #{multihead2_forward.8} parent=27 // pred_check_branch
                %209 = sbr.rel (0) target = $region43
              $region42: #{multihead2_forward.8} parent=27 // pred_region
                loop: start=0, step=1, limit=1
                $region44: #{multihead2_forward.8} parent=42 // loop_pre_header
                  _
                $region45: #{multihead2_forward.8} parent=42 // loop_header
                  %s211 = sphi 0, %s215
                  %p212 = scmp.ge.s32.totalorder %s211, 1
                  %s216 = sphi %s187, %s187
                  %s217 = sphi %s180, %s180
                $region46: #{multihead2_forward.8} parent=42 // loop_header_branch
                  %214 = sbr.rel (%p212) target = $region50
                $region47: #{multihead2_forward.8} parent=42 // loop_body
                  %v218 = vld [vmem:[%s216] sm:$0xff]
                  %219 = vst [vmem:[%s217] sm:$0xff] %v218
                  %v220 = vld [vmem:[%s216 + $0x20] sm:$0xff]
                  %221 = vst [vmem:[%s217 + $0x8] sm:$0xff] %v220
                $region48: #{multihead2_forward.8} parent=42 // loop_footer
                  %s215 = sadd.s32 1, %s211
                $region49: #{multihead2_forward.8} parent=42 // loop_footer_branch
                  %210 = sbr.rel target = $region45
                $region50: #{multihead2_forward.8} parent=42 // loop_exit
                  _
              $region43: #{multihead2_forward.8} parent=27 // pred_fallthru
                _
              // Predicated region
              $region51: #{multihead2_forward.8} parent=27 // pred_check
                _
              $region52: #{multihead2_forward.8} parent=27 // pred_check_branch
                %223 = sbr.rel target = $region54
              $region53: #{multihead2_forward.8} parent=27 // pred_region
                _
              $region54: #{multihead2_forward.8} parent=27 // pred_fallthru
                _
            $region28: #{multihead2_forward.8} parent=23 // pred_fallthru
              _
            // Predicated region
            $region29: #{multihead2_forward.8} parent=23 // pred_check
              _
            $region30: #{multihead2_forward.8} parent=23 // pred_check_branch
              %193 = sbr.rel target = $region32
            $region31: #{multihead2_forward.8} parent=23 // pred_region
              %s195 = ssub.s32 256, 1
              loop: start=0, step=1, limit=1
              $region33: #{multihead2_forward.8} parent=31 // loop_pre_header
                _
              $region34: #{multihead2_forward.8} parent=31 // loop_header
                %s197 = sphi 0, %s201
                %p198 = scmp.ge.s32.totalorder %s197, 1
                %s202 = sphi %s187, %s187
                %s203 = sphi %s180, %s180
              $region35: #{multihead2_forward.8} parent=31 // loop_header_branch
                %200 = sbr.rel (%p198) target = $region39
              $region36: #{multihead2_forward.8} parent=31 // loop_body
                %v204 = vld [vmem:[%s202] sm:%s195]
                %205 = vst [vmem:[%s203] sm:%s195] %v204
                %v206 = vld [vmem:[%s202 + $0x20] sm:%s195]
                %207 = vst [vmem:[%s203 + $0x8] sm:%s195] %v206
              $region37: #{multihead2_forward.8} parent=31 // loop_footer
                %s201 = sadd.s32 1, %s197
              $region38: #{multihead2_forward.8} parent=31 // loop_footer_branch
                %196 = sbr.rel target = $region34
              $region39: #{multihead2_forward.8} parent=31 // loop_exit
                _
            $region32: #{multihead2_forward.8} parent=23 // pred_fallthru
              _
          $region24: #{multihead2_forward.8} parent=19 // pred_fallthru
            _
          %224 = vnop
        $region20: #{multihead2_forward.8} parent=15 // pred_fallthru
          _
        // Predicated region
        $region55: #{multihead2_forward.8} parent=15 // pred_check
          %p225 = pneg %p89
        $region56: #{multihead2_forward.8} parent=15 // pred_check_branch
          %227 = sbr.rel (%p225) target = $region58
        $region57: #{multihead2_forward.8} parent=15 // pred_region
          %s228 = sand.u32 %s79, 1
          %s229 = sand.u32 %s79, 1
          %s230 = smul.addr %s229, 16
          %s231 = scalar_lea.vmem [#allocation6], %s230
          %s232 = smul.u32 2, %s19
          %s233 = smul.addr %s232, 4
          %s234 = sadd.s32 %s17, %s233
          %s235 = smul.addr %s16, 8
          %s236 = sadd.s32 %s234, %s235
          %s237 = smul.addr %s236, 8
          %s238 = scalar_lea.vmem %s1, %s237
          // Predicated region
          $region59: #{multihead2_forward.8} parent=57 // pred_check
            _
          $region60: #{multihead2_forward.8} parent=57 // pred_check_branch
            %240 = sbr.rel (0) target = $region62
          $region61: #{multihead2_forward.8} parent=57 // pred_region
            // Predicated region
            $region63: #{multihead2_forward.8} parent=61 // pred_check
              _
            $region64: #{multihead2_forward.8} parent=61 // pred_check_branch
              %242 = sbr.rel (0) target = $region66
            $region65: #{multihead2_forward.8} parent=61 // pred_region
              // Predicated region
              $region78: #{multihead2_forward.8} parent=65 // pred_check
                _
              $region79: #{multihead2_forward.8} parent=65 // pred_check_branch
                %260 = sbr.rel (0) target = $region81
              $region80: #{multihead2_forward.8} parent=65 // pred_region
                loop: start=0, step=1, limit=1
                $region82: #{multihead2_forward.8} parent=80 // loop_pre_header
                  _
                $region83: #{multihead2_forward.8} parent=80 // loop_header
                  %s262 = sphi 0, %s266
                  %p263 = scmp.ge.s32.totalorder %s262, 1
                  %s267 = sphi %s238, %s238
                  %s268 = sphi %s231, %s231
                $region84: #{multihead2_forward.8} parent=80 // loop_header_branch
                  %265 = sbr.rel (%p263) target = $region88
                $region85: #{multihead2_forward.8} parent=80 // loop_body
                  %v269 = vld [vmem:[%s267] sm:$0xff]
                  %270 = vst [vmem:[%s268] sm:$0xff] %v269
                  %v271 = vld [vmem:[%s267 + $0x20] sm:$0xff]
                  %272 = vst [vmem:[%s268 + $0x8] sm:$0xff] %v271
                $region86: #{multihead2_forward.8} parent=80 // loop_footer
                  %s266 = sadd.s32 1, %s262
                $region87: #{multihead2_forward.8} parent=80 // loop_footer_branch
                  %261 = sbr.rel target = $region83
                $region88: #{multihead2_forward.8} parent=80 // loop_exit
                  _
              $region81: #{multihead2_forward.8} parent=65 // pred_fallthru
                _
              // Predicated region
              $region89: #{multihead2_forward.8} parent=65 // pred_check
                _
              $region90: #{multihead2_forward.8} parent=65 // pred_check_branch
                %274 = sbr.rel target = $region92
              $region91: #{multihead2_forward.8} parent=65 // pred_region
                _
              $region92: #{multihead2_forward.8} parent=65 // pred_fallthru
                _
            $region66: #{multihead2_forward.8} parent=61 // pred_fallthru
              _
            // Predicated region
            $region67: #{multihead2_forward.8} parent=61 // pred_check
              _
            $region68: #{multihead2_forward.8} parent=61 // pred_check_branch
              %244 = sbr.rel target = $region70
            $region69: #{multihead2_forward.8} parent=61 // pred_region
              %s246 = ssub.s32 256, 1
              loop: start=0, step=1, limit=1
              $region71: #{multihead2_forward.8} parent=69 // loop_pre_header
                _
              $region72: #{multihead2_forward.8} parent=69 // loop_header
                %s248 = sphi 0, %s252
                %p249 = scmp.ge.s32.totalorder %s248, 1
                %s253 = sphi %s238, %s238
                %s254 = sphi %s231, %s231
              $region73: #{multihead2_forward.8} parent=69 // loop_header_branch
                %251 = sbr.rel (%p249) target = $region77
              $region74: #{multihead2_forward.8} parent=69 // loop_body
                %v255 = vld [vmem:[%s253] sm:%s246]
                %256 = vst [vmem:[%s254] sm:%s246] %v255
                %v257 = vld [vmem:[%s253 + $0x20] sm:%s246]
                %258 = vst [vmem:[%s254 + $0x8] sm:%s246] %v257
              $region75: #{multihead2_forward.8} parent=69 // loop_footer
                %s252 = sadd.s32 1, %s248
              $region76: #{multihead2_forward.8} parent=69 // loop_footer_branch
                %247 = sbr.rel target = $region72
              $region77: #{multihead2_forward.8} parent=69 // loop_exit
                _
            $region70: #{multihead2_forward.8} parent=61 // pred_fallthru
              _
          $region62: #{multihead2_forward.8} parent=57 // pred_fallthru
            _
          %275 = vnop
        $region58: #{multihead2_forward.8} parent=15 // pred_fallthru
          _
        // Predicated region
        $region93: #{multihead2_forward.8} parent=15 // pred_check
          %p276 = pneg %p119
        $region94: #{multihead2_forward.8} parent=15 // pred_check_branch
          %278 = sbr.rel (%p276) target = $region96
        $region95: #{multihead2_forward.8} parent=15 // pred_region
          %s279 = sand.u32 %s109, 1
          %s280 = sand.u32 %s109, 1
          %s281 = smul.addr %s280, 16
          %s282 = scalar_lea.vmem [#allocation7], %s281
          %s283 = smul.u32 2, %s19
          %s284 = smul.addr %s283, 4
          %s285 = sadd.s32 %s17, %s284
          %s286 = smul.addr %s16, 8
          %s287 = sadd.s32 %s285, %s286
          %s288 = smul.addr %s287, 8
          %s289 = scalar_lea.vmem %s2, %s288
          // Predicated region
          $region97: #{multihead2_forward.8} parent=95 // pred_check
            _
          $region98: #{multihead2_forward.8} parent=95 // pred_check_branch
            %291 = sbr.rel (0) target = $region100
          $region99: #{multihead2_forward.8} parent=95 // pred_region
            // Predicated region
            $region101: #{multihead2_forward.8} parent=99 // pred_check
              _
            $region102: #{multihead2_forward.8} parent=99 // pred_check_branch
              %293 = sbr.rel (0) target = $region104
            $region103: #{multihead2_forward.8} parent=99 // pred_region
              // Predicated region
              $region116: #{multihead2_forward.8} parent=103 // pred_check
                _
              $region117: #{multihead2_forward.8} parent=103 // pred_check_branch
                %311 = sbr.rel (0) target = $region119
              $region118: #{multihead2_forward.8} parent=103 // pred_region
                loop: start=0, step=1, limit=1
                $region120: #{multihead2_forward.8} parent=118 // loop_pre_header
                  _
                $region121: #{multihead2_forward.8} parent=118 // loop_header
                  %s313 = sphi 0, %s317
                  %p314 = scmp.ge.s32.totalorder %s313, 1
                  %s318 = sphi %s289, %s289
                  %s319 = sphi %s282, %s282
                $region122: #{multihead2_forward.8} parent=118 // loop_header_branch
                  %316 = sbr.rel (%p314) target = $region126
                $region123: #{multihead2_forward.8} parent=118 // loop_body
                  %v320 = vld [vmem:[%s318] sm:$0xff]
                  %321 = vst [vmem:[%s319] sm:$0xff] %v320
                  %v322 = vld [vmem:[%s318 + $0x20] sm:$0xff]
                  %323 = vst [vmem:[%s319 + $0x8] sm:$0xff] %v322
                $region124: #{multihead2_forward.8} parent=118 // loop_footer
                  %s317 = sadd.s32 1, %s313
                $region125: #{multihead2_forward.8} parent=118 // loop_footer_branch
                  %312 = sbr.rel target = $region121
                $region126: #{multihead2_forward.8} parent=118 // loop_exit
                  _
              $region119: #{multihead2_forward.8} parent=103 // pred_fallthru
                _
              // Predicated region
              $region127: #{multihead2_forward.8} parent=103 // pred_check
                _
              $region128: #{multihead2_forward.8} parent=103 // pred_check_branch
                %325 = sbr.rel target = $region130
              $region129: #{multihead2_forward.8} parent=103 // pred_region
                _
              $region130: #{multihead2_forward.8} parent=103 // pred_fallthru
                _
            $region104: #{multihead2_forward.8} parent=99 // pred_fallthru
              _
            // Predicated region
            $region105: #{multihead2_forward.8} parent=99 // pred_check
              _
            $region106: #{multihead2_forward.8} parent=99 // pred_check_branch
              %295 = sbr.rel target = $region108
            $region107: #{multihead2_forward.8} parent=99 // pred_region
              %s297 = ssub.s32 256, 1
              loop: start=0, step=1, limit=1
              $region109: #{multihead2_forward.8} parent=107 // loop_pre_header
                _
              $region110: #{multihead2_forward.8} parent=107 // loop_header
                %s299 = sphi 0, %s303
                %p300 = scmp.ge.s32.totalorder %s299, 1
                %s304 = sphi %s289, %s289
                %s305 = sphi %s282, %s282
              $region111: #{multihead2_forward.8} parent=107 // loop_header_branch
                %302 = sbr.rel (%p300) target = $region115
              $region112: #{multihead2_forward.8} parent=107 // loop_body
                %v306 = vld [vmem:[%s304] sm:%s297]
                %307 = vst [vmem:[%s305] sm:%s297] %v306
                %v308 = vld [vmem:[%s304 + $0x20] sm:%s297]
                %309 = vst [vmem:[%s305 + $0x8] sm:%s297] %v308
              $region113: #{multihead2_forward.8} parent=107 // loop_footer
                %s303 = sadd.s32 1, %s299
              $region114: #{multihead2_forward.8} parent=107 // loop_footer_branch
                %298 = sbr.rel target = $region110
              $region115: #{multihead2_forward.8} parent=107 // loop_exit
                _
            $region108: #{multihead2_forward.8} parent=99 // pred_fallthru
              _
          $region100: #{multihead2_forward.8} parent=95 // pred_fallthru
            _
          %326 = vnop
        $region96: #{multihead2_forward.8} parent=15 // pred_fallthru
          _
      $region16: #{multihead2_forward.8} parent=5 // pred_fallthru
        _
      %p327 = scmp.le.s32.totalorder 1, %s9
      %p328 = scmp.lt.s32.totalorder %s9, 9
      %p329 = pnand %p327, %p328
      %p330 = pneg %p329
      // Predicated region
      $region131: #{multihead2_forward.8} parent=5 // pred_check
        _
      $region132: #{multihead2_forward.8} parent=5 // pred_check_branch
        %332 = sbr.rel (%p329) target = $region134
      $region133: #{multihead2_forward.8} parent=5 // pred_region
        %s333 = ssub.s32 %s9, 1
        %s334 = sand.u32 %s52, 1
        %s335 = sand.u32 %s52, 1
        %s336 = smul.addr %s335, 16
        %s337 = scalar_lea.vmem [#allocation5], %s336
        // Predicated region
        $region135: #{multihead2_forward.8} parent=133 // pred_check
          %p338 = pneg %p65
        $region136: #{multihead2_forward.8} parent=133 // pred_check_branch
          %340 = sbr.rel (%p338) target = $region138
        $region137: #{multihead2_forward.8} parent=133 // pred_region
          _
        $region138: #{multihead2_forward.8} parent=133 // pred_fallthru
          _
        %s341 = sand.u32 %s82, 1
        %s342 = sand.u32 %s82, 1
        %s343 = smul.addr %s342, 16
        %s344 = scalar_lea.vmem [#allocation6], %s343
        // Predicated region
        $region139: #{multihead2_forward.8} parent=133 // pred_check
          %p345 = pneg %p95
        $region140: #{multihead2_forward.8} parent=133 // pred_check_branch
          %347 = sbr.rel (%p345) target = $region142
        $region141: #{multihead2_forward.8} parent=133 // pred_region
          _
        $region142: #{multihead2_forward.8} parent=133 // pred_fallthru
          _
        %s348 = sand.u32 %s112, 1
        %s349 = sand.u32 %s112, 1
        %s350 = smul.addr %s349, 16
        %s351 = scalar_lea.vmem [#allocation7], %s350
        // Predicated region
        $region143: #{multihead2_forward.8} parent=133 // pred_check
          %p352 = pneg %p125
        $region144: #{multihead2_forward.8} parent=133 // pred_check_branch
          %354 = sbr.rel (%p352) target = $region146
        $region145: #{multihead2_forward.8} parent=133 // pred_region
          _
        $region146: #{multihead2_forward.8} parent=133 // pred_fallthru
          _
        %s355 = sand.u32 %s52, 1
        %s356 = sand.u32 %s52, 1
        %s357 = smul.addr %s356, 16
        %s358 = scalar_lea.vmem [#allocation5], %s357
        %p359 = pneg %p65
        %p360 = pneg %p62
        %s361 = sand.u32 %s82, 1
        %s362 = sand.u32 %s82, 1
        %s363 = smul.addr %s362, 16
        %s364 = scalar_lea.vmem [#allocation6], %s363
        %p365 = pneg %p95
        %p366 = pneg %p92
        %s367 = sand.u32 %s112, 1
        %s368 = sand.u32 %s112, 1
        %s369 = smul.addr %s368, 16
        %s370 = scalar_lea.vmem [#allocation7], %s369
        %p371 = pneg %p125
        %p372 = pneg %p122
        %p373 = pneg %p155
        %p374 = pneg %p152
        %s375 = sand.u32 %s142, 1
        %s376 = sand.u32 %s142, 1
        %s377 = smul.addr %s376, 16
        %s378 = scalar_lea.vmem [#allocation8], %s377
        %s379 = smul.u32 2, %s22
        %s380 = smul.u32 2, %s23
        %s381 = smul.u32 2, %s23
        %s382 = smul.u32 2, %s22
        %p383 = scmp.eq.s32.totalorder %s23, 0
        // Predicated region
        $region147: #{multihead2_forward.8} parent=133 // pred_check
          %p384 = pneg %p383
        $region148: #{multihead2_forward.8} parent=133 // pred_check_branch
          %386 = sbr.rel (%p384) target = $region150
        $region149: #{multihead2_forward.8} parent=133 // pred_region
          %vm387 = vcmask 7168
          %388 = vst.msk [vmem:[#allocation2] sm:$0xff] %vm387, -inf
          %389 = vst.msk [vmem:[#allocation2 + $0x8] sm:$0xff] %vm387, -inf
          %390 = vst.msk [vmem:[#allocation3] sm:$0xff] %vm387, 0.0
          %391 = vst.msk [vmem:[#allocation3 + $0x8] sm:$0xff] %vm387, 0.0
          %392 = vst [vmem:[#allocation4] sm:$0xff] 0.0
          %393 = vst [vmem:[#allocation4 + $0x8] sm:$0xff] 0.0
        $region150: #{multihead2_forward.8} parent=133 // pred_fallthru
          _
        %v394 = vld [vmem:[%s337] sm:$0xff]
        %v395 = vld [vmem:[%s337 + $0x8] sm:$0xff]
        %v396 = vld [vmem:[%s344] sm:$0xff]
        %v397 = vld [vmem:[%s344 + $0x8] sm:$0xff]
        %v398 = vld [vmem:[%s351] sm:$0xff]
        %v399 = vld [vmem:[%s351 + $0x8] sm:$0xff]
        %400 = vmatpush.xpose.msra.mxu0 0.0
        %401 = vmatpush.xpose.msra.mxu0 0.0
        %402 = vmatpush.xpose.msra.mxu0 0.0
        %403 = vmatpush.xpose.msra.mxu0 0.0
        %404 = vmatpush.xpose.msra.mxu0 0.0
        %405 = vmatpush.xpose.msra.mxu0 0.0
        %406 = vmatpush.xpose.msra.mxu0 0.0
        %407 = vmatpush.xpose.msra.mxu0 0.0
        %408 = vmatpush.xpose.msra.mxu0 0.0
        %409 = vmatpush.xpose.msra.mxu0 0.0
        %410 = vmatpush.xpose.msra.mxu0 0.0
        %411 = vmatpush.xpose.msra.mxu0 0.0
        %412 = vmatpush.xpose.msra.mxu0 0.0
        %413 = vmatpush.xpose.msra.mxu0 0.0
        %414 = vmatpush.xpose.msra.mxu0 %v397
        %415 = vmatpush.xpose.msra.mxu0 %v396
        %416 = vmatmul.f32.gmra.mxu0 %v394
        %v417 = vpop.f32.mrf.mxu0
        %v418 = vadd.f32 0.0, %v417
        %419 = vmatmul.f32.gmra.mxu0 %v395
        %v420 = vpop.f32.mrf.mxu0
        %v421 = vadd.f32 0.0, %v420
        %422 = vdwg.mxu0
        %v423 = vmul.f32 %v418, 0.044194173
        %v424 = vmul.f32 %v421, 0.044194173
        %v425 = vld [vmem:[#allocation2] sm:$0xff]
        %v426 = vld [vmem:[#allocation2 + $0x8] sm:$0xff]
        %vm427 = vcmask 130048
        %v428 = vsel %vm427, %v423, -inf
        %429 = vmax.xlane.f32.xlu0 %v428
        %v430 = vpop.xlane.xlu0 %429
        %v431 = vsel %vm427, %v424, -inf
        %432 = vmax.xlane.f32.xlu0 %v431
        %v433 = vpop.xlane.xlu0 %432
        %v434 = vmax.f32 %v425, %v430
        %v435 = vmax.f32 %v426, %v433
        %v436 = vsub.f32 %v425, %v434
        %v437 = vsub.f32 %v426, %v435
        %v438 = vmul.f32 %v436, 1.442695
        %v439 = vpow.pop %v438
        %v440 = vmul.f32 %v437, 1.442695
        %v441 = vpow.pop %v440
        %443 = vset.pattern.permute.xlu0 0
        %444 = vperm.xlu0 %443, %v434
        %v445 = vpop.permute.xlu0 %444
        %448 = vset.pattern.permute.xlu0 0
        %449 = vperm.xlu0 %448, %v435
        %v450 = vpop.permute.xlu0 %449
        %v452 = vsub.f32 %v423, %v445
        %v453 = vsub.f32 %v424, %v450
        %v454 = vmul.f32 %v452, 1.442695
        %v455 = vpow.pop %v454
        %v456 = vmul.f32 %v453, 1.442695
        %v457 = vpow.pop %v456
        %v458 = vld [vmem:[#allocation3] sm:$0xff]
        %v459 = vld [vmem:[#allocation3 + $0x8] sm:$0xff]
        %v460 = vmul.f32 %v439, %v458
        %v461 = vmul.f32 %v441, %v459
        %v462 = vsel %vm427, %v455, 0.0
        %463 = vadd.xlane.f32.xlu0 %v462
        %v464 = vpop.xlane.xlu0 %463
        %v465 = vsel %vm427, %v457, 0.0
        %466 = vadd.xlane.f32.xlu0 %v465
        %v467 = vpop.xlane.xlu0 %466
        %v468 = vadd.f32 %v460, %v464
        %v469 = vadd.f32 %v461, %v467
        %vm470 = vcmask 7168
        %471 = vst.msk [vmem:[#allocation3] sm:$0xff] %vm470, %v468
        %472 = vst.msk [vmem:[#allocation3 + $0x8] sm:$0xff] %vm470, %v469
        %v473 = vld [vmem:[#allocation4] sm:$0xff]
        %v474 = vld [vmem:[#allocation4 + $0x8] sm:$0xff]
        %476 = vset.pattern.permute.xlu0 0
        %477 = vperm.xlu0 %476, %v439
        %v478 = vpop.permute.xlu0 %477
        %481 = vset.pattern.permute.xlu0 0
        %482 = vperm.xlu0 %481, %v441
        %v483 = vpop.permute.xlu0 %482
        %v485 = vmul.f32 %v478, %v473
        %v486 = vmul.f32 %v483, %v474
        %v488 = vsel %vm427, %v455, 0
        %v491 = vsel %vm427, %v457, 0
        %493 = vmatpush.msra.mxu0 0.0
        %494 = vmatpush.msra.mxu0 0.0
        %495 = vmatpush.msra.mxu0 0.0
        %496 = vmatpush.msra.mxu0 0.0
        %497 = vmatpush.msra.mxu0 0.0
        %498 = vmatpush.msra.mxu0 0.0
        %499 = vmatpush.msra.mxu0 0.0
        %500 = vmatpush.msra.mxu0 0.0
        %501 = vmatpush.msra.mxu0 0.0
        %502 = vmatpush.msra.mxu0 0.0
        %503 = vmatpush.msra.mxu0 0.0
        %504 = vmatpush.msra.mxu0 0.0
        %505 = vmatpush.msra.mxu0 0.0
        %506 = vmatpush.msra.mxu0 0.0
        %507 = vmatpush.msra.mxu0 %v399
        %508 = vmatpush.msra.mxu0 %v398
        %509 = vmatmul.f32.gmra.mxu0 %v488
        %v510 = vpop.f32.mrf.mxu0
        %v511 = vadd.f32 0.0, %v510
        %512 = vmatmul.f32.gmra.mxu0 %v491
        %v513 = vpop.f32.mrf.mxu0
        %v514 = vadd.f32 0.0, %v513
        %515 = vdwg.mxu0
        %v516 = vadd.f32 %v485, %v511
        %v517 = vadd.f32 %v486, %v514
        %518 = vst [vmem:[#allocation4] sm:$0xff] %v516
        %519 = vst [vmem:[#allocation4 + $0x8] sm:$0xff] %v517
        %520 = vst.msk [vmem:[#allocation2] sm:$0xff] %vm470, %v434
        %521 = vst.msk [vmem:[#allocation2 + $0x8] sm:$0xff] %vm470, %v435
        // Predicated region
        $region151: #{multihead2_forward.8} parent=133 // pred_check
          %p522 = pneg %p383
        $region152: #{multihead2_forward.8} parent=133 // pred_check_branch
          %524 = sbr.rel (%p522) target = $region154
        $region153: #{multihead2_forward.8} parent=133 // pred_region
          %v525 = vld [vmem:[#allocation4] sm:$0xff]
          %v526 = vld [vmem:[#allocation4 + $0x8] sm:$0xff]
          %v527 = vld [vmem:[#allocation3] sm:$0xff]
          %v528 = vld [vmem:[#allocation3 + $0x8] sm:$0xff]
          %530 = vset.pattern.permute.xlu0 0
          %531 = vperm.xlu0 %530, %v527
          %v532 = vpop.permute.xlu0 %531
          %535 = vset.pattern.permute.xlu0 0
          %536 = vperm.xlu0 %535, %v528
          %v537 = vpop.permute.xlu0 %536
          %v539 = vrcp.pop %v532
          %v540 = vmul.f32 %v532, %v539
          %v541 = vsub.f32 1.0, %v540
          %v542 = vmul.f32 %v539, %v541
          %v543 = vadd.f32 %v539, %v542
          %vm544 = vweird.f32 %v532
          %vm545 = vweird.f32 %v539
          %vm546 = vmor %vm544, %vm545
          %v547 = vsel %vm546, %v539, %v543
          %v548 = vand.u32 2147483647, %v532
          %vm549 = vcmp.eq.f32.partialorder %v548, 8.507059e+37
          %v550 = vand.u32 %v532, 2147483648
          %v551 = vor.u32 1.1754944e-38, %v550
          %v552 = vsel %vm549, %v551, %v547
          %v553 = vmul.f32 %v525, %v552
          %v554 = vrcp.pop %v537
          %v555 = vmul.f32 %v537, %v554
          %v556 = vsub.f32 1.0, %v555
          %v557 = vmul.f32 %v554, %v556
          %v558 = vadd.f32 %v554, %v557
          %vm559 = vweird.f32 %v537
          %vm560 = vweird.f32 %v554
          %vm561 = vmor %vm559, %vm560
          %v562 = vsel %vm561, %v554, %v558
          %v563 = vand.u32 2147483647, %v537
          %vm564 = vcmp.eq.f32.partialorder %v563, 8.507059e+37
          %v565 = vand.u32 %v537, 2147483648
          %v566 = vor.u32 1.1754944e-38, %v565
          %v567 = vsel %vm564, %v566, %v562
          %v568 = vmul.f32 %v526, %v567
          %569 = vst [vmem:[%s378] sm:$0xff] %v553
          %570 = vst [vmem:[%s378 + $0x8] sm:$0xff] %v568
        $region154: #{multihead2_forward.8} parent=133 // pred_fallthru
          _
        %s571 = sand.u32 %s142, 1
        %s572 = sand.u32 %s142, 1
        %s573 = smul.addr %s572, 16
        %s574 = scalar_lea.vmem [#allocation8], %s573
        // Predicated region
        $region155: #{multihead2_forward.8} parent=133 // pred_check
          %p575 = pneg %p152
        $region156: #{multihead2_forward.8} parent=133 // pred_check_branch
          %577 = sbr.rel (%p575) target = $region158
        $region157: #{multihead2_forward.8} parent=133 // pred_region
          %s578 = smul.u32 2, %s22
          %s579 = smul.addr %s578, 4
          %s580 = sadd.s32 %s21, %s579
          %s581 = smul.addr %s20, 8
          %s582 = sadd.s32 %s580, %s581
          %s583 = smul.addr %s582, 8
          %s584 = scalar_lea.vmem %s3, %s583
          // Predicated region
          $region159: #{multihead2_forward.8} parent=157 // pred_check
            _
          $region160: #{multihead2_forward.8} parent=157 // pred_check_branch
            %586 = sbr.rel (0) target = $region162
          $region161: #{multihead2_forward.8} parent=157 // pred_region
            // Predicated region
            $region163: #{multihead2_forward.8} parent=161 // pred_check
              _
            $region164: #{multihead2_forward.8} parent=161 // pred_check_branch
              %588 = sbr.rel (0) target = $region166
            $region165: #{multihead2_forward.8} parent=161 // pred_region
              // Predicated region
              $region178: #{multihead2_forward.8} parent=165 // pred_check
                _
              $region179: #{multihead2_forward.8} parent=165 // pred_check_branch
                %606 = sbr.rel (0) target = $region181
              $region180: #{multihead2_forward.8} parent=165 // pred_region
                loop: start=0, step=1, limit=1
                $region182: #{multihead2_forward.8} parent=180 // loop_pre_header
                  _
                $region183: #{multihead2_forward.8} parent=180 // loop_header
                  %s608 = sphi 0, %s612
                  %p609 = scmp.ge.s32.totalorder %s608, 1
                  %s613 = sphi %s574, %s574
                  %s614 = sphi %s584, %s584
                $region184: #{multihead2_forward.8} parent=180 // loop_header_branch
                  %611 = sbr.rel (%p609) target = $region188
                $region185: #{multihead2_forward.8} parent=180 // loop_body
                  %v615 = vld [vmem:[%s613] sm:$0xff]
                  %616 = vst [vmem:[%s614] sm:$0xff] %v615
                  %v617 = vld [vmem:[%s613 + $0x8] sm:$0xff]
                  %618 = vst [vmem:[%s614 + $0x20] sm:$0xff] %v617
                $region186: #{multihead2_forward.8} parent=180 // loop_footer
                  %s612 = sadd.s32 1, %s608
                $region187: #{multihead2_forward.8} parent=180 // loop_footer_branch
                  %607 = sbr.rel target = $region183
                $region188: #{multihead2_forward.8} parent=180 // loop_exit
                  _
              $region181: #{multihead2_forward.8} parent=165 // pred_fallthru
                _
              // Predicated region
              $region189: #{multihead2_forward.8} parent=165 // pred_check
                _
              $region190: #{multihead2_forward.8} parent=165 // pred_check_branch
                %620 = sbr.rel target = $region192
              $region191: #{multihead2_forward.8} parent=165 // pred_region
                _
              $region192: #{multihead2_forward.8} parent=165 // pred_fallthru
                _
            $region166: #{multihead2_forward.8} parent=161 // pred_fallthru
              _
            // Predicated region
            $region167: #{multihead2_forward.8} parent=161 // pred_check
              _
            $region168: #{multihead2_forward.8} parent=161 // pred_check_branch
              %590 = sbr.rel target = $region170
            $region169: #{multihead2_forward.8} parent=161 // pred_region
              %s592 = ssub.s32 256, 1
              loop: start=0, step=1, limit=1
              $region171: #{multihead2_forward.8} parent=169 // loop_pre_header
                _
              $region172: #{multihead2_forward.8} parent=169 // loop_header
                %s594 = sphi 0, %s598
                %p595 = scmp.ge.s32.totalorder %s594, 1
                %s599 = sphi %s574, %s574
                %s600 = sphi %s584, %s584
              $region173: #{multihead2_forward.8} parent=169 // loop_header_branch
                %597 = sbr.rel (%p595) target = $region177
              $region174: #{multihead2_forward.8} parent=169 // loop_body
                %v601 = vld [vmem:[%s599] sm:%s592]
                %602 = vst [vmem:[%s600] sm:%s592] %v601
                %v603 = vld [vmem:[%s599 + $0x8] sm:%s592]
                %604 = vst [vmem:[%s600 + $0x20] sm:%s592] %v603
              $region175: #{multihead2_forward.8} parent=169 // loop_footer
                %s598 = sadd.s32 1, %s594
              $region176: #{multihead2_forward.8} parent=169 // loop_footer_branch
                %593 = sbr.rel target = $region172
              $region177: #{multihead2_forward.8} parent=169 // loop_exit
                _
            $region170: #{multihead2_forward.8} parent=161 // pred_fallthru
              _
          $region162: #{multihead2_forward.8} parent=157 // pred_fallthru
            _
          %621 = vnop
        $region158: #{multihead2_forward.8} parent=133 // pred_fallthru
          _
      $region134: #{multihead2_forward.8} parent=5 // pred_fallthru
        _
      %p622 = scmp.le.s32.totalorder 2, %s9
      // Predicated region
      $region193: #{multihead2_forward.8} parent=5 // pred_check
        %p623 = pneg %p622
      $region194: #{multihead2_forward.8} parent=5 // pred_check_branch
        %625 = sbr.rel (%p623) target = $region196
      $region195: #{multihead2_forward.8} parent=5 // pred_region
        %s626 = ssub.s32 %s9, 2
        // Predicated region
        $region197: #{multihead2_forward.8} parent=195 // pred_check
          %p627 = pneg %p158
        $region198: #{multihead2_forward.8} parent=195 // pred_check_branch
          %629 = sbr.rel (%p627) target = $region200
        $region199: #{multihead2_forward.8} parent=195 // pred_region
          %s630 = sand.u32 %s143, 1
          %s631 = sand.u32 %s143, 1
          %s632 = smul.addr %s631, 16
          %s633 = scalar_lea.vmem [#allocation8], %s632
        $region200: #{multihead2_forward.8} parent=195 // pred_fallthru
          _
      $region196: #{multihead2_forward.8} parent=5 // pred_fallthru
        _
    $region6: #{multihead2_forward.8} parent=1 // loop_footer
      %s13 = sadd.s32 1, %s9
    $region7: #{multihead2_forward.8} parent=1 // loop_footer_branch
      %8 = sbr.rel target = $region3
    $region8: #{multihead2_forward.8} parent=1 // loop_exit
      _

// kernel: multihead2_forward.9
$region0: #{multihead2_forward.9}
  #allocation0 [shape = 'u32[]', space=smem, size = 0x4, offset = 0x4, fixed_abs, tag = 'smem constant byte address 0x4 - core index']
  #allocation1 [shape = 'u32[72,128]{1,0:T(1,128)}', space=vmem, size = 0x9000, scoped, tag = 'internal scratch']
  %s0 = inlined_call_operand.vmem [shape: f32[32,512], index: 0, kind: input, shape index: {}]
  %s1 = inlined_call_operand.hbm [shape: f32[512,512], index: 1, kind: input, shape index: {}]
  %s2 = inlined_call_operand.vmem [shape: f32[1,512], index: 2, kind: input, shape index: {}]
  %s3 = inlined_call_operand.hbm [shape: f32[32,512], index: 3, kind: output, shape index: {}]
  %s4 = sld [smem:[#allocation0]]
  $region26: #{multihead2_forward.9} parent=0
    _
  %s6 = ssub.s32 1, %s4
  %s7 = scalar_select 0, %s6, %s4
  $region1: #{multihead2_forward.9} parent=0
    #allocation2 [shape = 'u8[1048576]{0}', space=vmem, size = 0x100000, scoped, tag = 'input window, operand 1, single buffered']
    #allocation3 [shape = 's32[1]{0}', space=sflag, size = 0x4, scoped, tag = 'scoped memory for multihead2_forward.9']
    #allocation4 [shape = 's32[1]{0}', space=sflag, size = 0x4, scoped, tag = 'scoped memory for multihead2_forward.9']
    #allocation5 [shape = 'u8[65536]{0}', space=vmem, size = 0x10000, scoped, tag = 'output window, operand 0, single buffered']
    %8 = vsyncpa [#allocation3], 0
    %9 = vsyncpa [#allocation4], 0
    // Predicated region
    $region2: #{multihead2_forward.9} parent=1 // pred_check
      _
    $region3: #{multihead2_forward.9} parent=1 // pred_check_branch
      %11 = sbr.rel (0) target = $region5
    $region4: #{multihead2_forward.9} parent=1 // pred_region
      _
    $region5: #{multihead2_forward.9} parent=1 // pred_fallthru
      _
    // Predicated region
    $region6: #{multihead2_forward.9} parent=1 // pred_check
      _
    $region7: #{multihead2_forward.9} parent=1 // pred_check_branch
      %13 = sbr.rel (0) target = $region9
    $region8: #{multihead2_forward.9} parent=1 // pred_region
      %15 = vsyncadd [#allocation3], 0
      %s16 = sshll.u32 %s1, 4
      %s17 = int_to_ptr.hbm [resolvable:$true] %s16
      %s18 = sshll.u32 [#allocation2], 4
      %s19 = int_to_ptr.vmem [resolvable:$true] %s18
      %24 = dma.hbm_to_vmem [thread:$0]  %s17, 32768, %s19, [#allocation3], 512, 512, 32
    $region9: #{multihead2_forward.9} parent=1 // pred_fallthru
      _
    // Predicated region
    $region10: #{multihead2_forward.9} parent=1 // pred_check
      _
    $region11: #{multihead2_forward.9} parent=1 // pred_check_branch
      %26 = sbr.rel (0) target = $region13
    $region12: #{multihead2_forward.9} parent=1 // pred_region
      _
    $region13: #{multihead2_forward.9} parent=1 // pred_fallthru
      _
    // Predicated region
    $region14: #{multihead2_forward.9} parent=1 // pred_check
      _
    $region15: #{multihead2_forward.9} parent=1 // pred_check_branch
      %28 = sbr.rel (0) target = $region17
    $region16: #{multihead2_forward.9} parent=1 // pred_region
      %30 = dma.done [#allocation3], 32768
    $region17: #{multihead2_forward.9} parent=1 // pred_fallthru
      _
    %v31 = vld [vmem:[%s0] sm:$0xff]
    %v32 = vld [vmem:[%s0 + $0x8] sm:$0xff]
    %v33 = vld [vmem:[%s0 + $0x10] sm:$0xff]
    %v34 = vld [vmem:[%s0 + $0x18] sm:$0xff]
    %v35 = vld [vmem:[%s0 + $0x20] sm:$0xff]
    %v36 = vld [vmem:[%s0 + $0x28] sm:$0xff]
    %v37 = vld [vmem:[%s0 + $0x30] sm:$0xff]
    %v38 = vld [vmem:[%s0 + $0x38] sm:$0xff]
    %v39 = vld [vmem:[%s0 + $0x40] sm:$0xff]
    %v40 = vld [vmem:[%s0 + $0x48] sm:$0xff]
    %v41 = vld [vmem:[%s0 + $0x50] sm:$0xff]
    %v42 = vld [vmem:[%s0 + $0x58] sm:$0xff]
    %v43 = vld [vmem:[%s0 + $0x60] sm:$0xff]
    %v44 = vld [vmem:[%s0 + $0x68] sm:$0xff]
    %v45 = vld [vmem:[%s0 + $0x70] sm:$0xff]
    %v46 = vld [vmem:[%s0 + $0x78] sm:$0xff]
    %v47 = vld [vmem:[#allocation2] sm:$0xff]
    %v48 = vld [vmem:[#allocation2 + $0x8] sm:$0xff]
    %v49 = vld [vmem:[#allocation2 + $0x10] sm:$0xff]
    %v50 = vld [vmem:[#allocation2 + $0x18] sm:$0xff]
    %v51 = vld [vmem:[#allocation2 + $0x20] sm:$0xff]
    %v52 = vld [vmem:[#allocation2 + $0x28] sm:$0xff]
    %v53 = vld [vmem:[#allocation2 + $0x30] sm:$0xff]
    %v54 = vld [vmem:[#allocation2 + $0x38] sm:$0xff]
    %v55 = vld [vmem:[#allocation2 + $0x40] sm:$0xff]
    %v56 = vld [vmem:[#allocation2 + $0x48] sm:$0xff]
    %v57 = vld [vmem:[#allocation2 + $0x50] sm:$0xff]
    %v58 = vld [vmem:[#allocation2 + $0x58] sm:$0xff]
    %v59 = vld [vmem:[#allocation2 + $0x60] sm:$0xff]
    %v60 = vld [vmem:[#allocation2 + $0x68] sm:$0xff]
    %v61 = vld [vmem:[#allocation2 + $0x70] sm:$0xff]
    %v62 = vld [vmem:[#allocation2 + $0x78] sm:$0xff]
    %v63 = vld [vmem:[#allocation2 + $0x80] sm:$0xff]
    %v64 = vld [vmem:[#allocation2 + $0x88] sm:$0xff]
    %v65 = vld [vmem:[#allocation2 + $0x90] sm:$0xff]
    %v66 = vld [vmem:[#allocation2 + $0x98] sm:$0xff]
    %v67 = vld [vmem:[#allocation2 + $0xa0] sm:$0xff]
    %v68 = vld [vmem:[#allocation2 + $0xa8] sm:$0xff]
    %v69 = vld [vmem:[#allocation2 + $0xb0] sm:$0xff]
    %v70 = vld [vmem:[#allocation2 + $0xb8] sm:$0xff]
    %v71 = vld [vmem:[#allocation2 + $0xc0] sm:$0xff]
    %v72 = vld [vmem:[#allocation2 + $0xc8] sm:$0xff]
    %v73 = vld [vmem:[#allocation2 + $0xd0] sm:$0xff]
    %v74 = vld [vmem:[#allocation2 + $0xd8] sm:$0xff]
    %v75 = vld [vmem:[#allocation2 + $0xe0] sm:$0xff]
    %v76 = vld [vmem:[#allocation2 + $0xe8] sm:$0xff]
    %v77 = vld [vmem:[#allocation2 + $0xf0] sm:$0xff]
    %v78 = vld [vmem:[#allocation2 + $0xf8] sm:$0xff]
    %v79 = vld [vmem:[#allocation2 + $0x100] sm:$0xff]
    %v80 = vld [vmem:[#allocation2 + $0x108] sm:$0xff]
    %v81 = vld [vmem:[#allocation2 + $0x110] sm:$0xff]
    %v82 = vld [vmem:[#allocation2 + $0x118] sm:$0xff]
    %v83 = vld [vmem:[#allocation2 + $0x120] sm:$0xff]
    %v84 = vld [vmem:[#allocation2 + $0x128] sm:$0xff]
    %v85 = vld [vmem:[#allocation2 + $0x130] sm:$0xff]
    %v86 = vld [vmem:[#allocation2 + $0x138] sm:$0xff]
    %v87 = vld [vmem:[#allocation2 + $0x140] sm:$0xff]
    %v88 = vld [vmem:[#allocation2 + $0x148] sm:$0xff]
    %v89 = vld [vmem:[#allocation2 + $0x150] sm:$0xff]
    %v90 = vld [vmem:[#allocation2 + $0x158] sm:$0xff]
    %v91 = vld [vmem:[#allocation2 + $0x160] sm:$0xff]
    %v92 = vld [vmem:[#allocation2 + $0x168] sm:$0xff]
    %v93 = vld [vmem:[#allocation2 + $0x170] sm:$0xff]
    %v94 = vld [vmem:[#allocation2 + $0x178] sm:$0xff]
    %v95 = vld [vmem:[#allocation2 + $0x180] sm:$0xff]
    %v96 = vld [vmem:[#allocation2 + $0x188] sm:$0xff]
    %v97 = vld [vmem:[#allocation2 + $0x190] sm:$0xff]
    %v98 = vld [vmem:[#allocation2 + $0x198] sm:$0xff]
    %v99 = vld [vmem:[#allocation2 + $0x1a0] sm:$0xff]
    %v100 = vld [vmem:[#allocation2 + $0x1a8] sm:$0xff]
    %v101 = vld [vmem:[#allocation2 + $0x1b0] sm:$0xff]
    %v102 = vld [vmem:[#allocation2 + $0x1b8] sm:$0xff]
    %v103 = vld [vmem:[#allocation2 + $0x1c0] sm:$0xff]
    %v104 = vld [vmem:[#allocation2 + $0x1c8] sm:$0xff]
    %v105 = vld [vmem:[#allocation2 + $0x1d0] sm:$0xff]
    %v106 = vld [vmem:[#allocation2 + $0x1d8] sm:$0xff]
    %v107 = vld [vmem:[#allocation2 + $0x1e0] sm:$0xff]
    %v108 = vld [vmem:[#allocation2 + $0x1e8] sm:$0xff]
    %v109 = vld [vmem:[#allocation2 + $0x1f0] sm:$0xff]
    %v110 = vld [vmem:[#allocation2 + $0x1f8] sm:$0xff]
    %v111 = vld [vmem:[#allocation2 + $0x200] sm:$0xff]
    %v112 = vld [vmem:[#allocation2 + $0x208] sm:$0xff]
    %v113 = vld [vmem:[#allocation2 + $0x210] sm:$0xff]
    %v114 = vld [vmem:[#allocation2 + $0x218] sm:$0xff]
    %v115 = vld [vmem:[#allocation2 + $0x220] sm:$0xff]
    %v116 = vld [vmem:[#allocation2 + $0x228] sm:$0xff]
    %v117 = vld [vmem:[#allocation2 + $0x230] sm:$0xff]
    %v118 = vld [vmem:[#allocation2 + $0x238] sm:$0xff]
    %v119 = vld [vmem:[#allocation2 + $0x240] sm:$0xff]
    %v120 = vld [vmem:[#allocation2 + $0x248] sm:$0xff]
    %v121 = vld [vmem:[#allocation2 + $0x250] sm:$0xff]
    %v122 = vld [vmem:[#allocation2 + $0x258] sm:$0xff]
    %v123 = vld [vmem:[#allocation2 + $0x260] sm:$0xff]
    %v124 = vld [vmem:[#allocation2 + $0x268] sm:$0xff]
    %v125 = vld [vmem:[#allocation2 + $0x270] sm:$0xff]
    %v126 = vld [vmem:[#allocation2 + $0x278] sm:$0xff]
    %v127 = vld [vmem:[#allocation2 + $0x280] sm:$0xff]
    %v128 = vld [vmem:[#allocation2 + $0x288] sm:$0xff]
    %v129 = vld [vmem:[#allocation2 + $0x290] sm:$0xff]
    %v130 = vld [vmem:[#allocation2 + $0x298] sm:$0xff]
    %v131 = vld [vmem:[#allocation2 + $0x2a0] sm:$0xff]
    %v132 = vld [vmem:[#allocation2 + $0x2a8] sm:$0xff]
    %v133 = vld [vmem:[#allocation2 + $0x2b0] sm:$0xff]
    %v134 = vld [vmem:[#allocation2 + $0x2b8] sm:$0xff]
    %v135 = vld [vmem:[#allocation2 + $0x2c0] sm:$0xff]
    %v136 = vld [vmem:[#allocation2 + $0x2c8] sm:$0xff]
    %v137 = vld [vmem:[#allocation2 + $0x2d0] sm:$0xff]
    %v138 = vld [vmem:[#allocation2 + $0x2d8] sm:$0xff]
    %v139 = vld [vmem:[#allocation2 + $0x2e0] sm:$0xff]
    %v140 = vld [vmem:[#allocation2 + $0x2e8] sm:$0xff]
    %v141 = vld [vmem:[#allocation2 + $0x2f0] sm:$0xff]
    %v142 = vld [vmem:[#allocation2 + $0x2f8] sm:$0xff]
    %v143 = vld [vmem:[#allocation2 + $0x300] sm:$0xff]
    %v144 = vld [vmem:[#allocation2 + $0x308] sm:$0xff]
    %v145 = vld [vmem:[#allocation2 + $0x310] sm:$0xff]
    %v146 = vld [vmem:[#allocation2 + $0x318] sm:$0xff]
    %v147 = vld [vmem:[#allocation2 + $0x320] sm:$0xff]
    %v148 = vld [vmem:[#allocation2 + $0x328] sm:$0xff]
    %v149 = vld [vmem:[#allocation2 + $0x330] sm:$0xff]
    %v150 = vld [vmem:[#allocation2 + $0x338] sm:$0xff]
    %v151 = vld [vmem:[#allocation2 + $0x340] sm:$0xff]
    %v152 = vld [vmem:[#allocation2 + $0x348] sm:$0xff]
    %v153 = vld [vmem:[#allocation2 + $0x350] sm:$0xff]
    %v154 = vld [vmem:[#allocation2 + $0x358] sm:$0xff]
    %v155 = vld [vmem:[#allocation2 + $0x360] sm:$0xff]
    %v156 = vld [vmem:[#allocation2 + $0x368] sm:$0xff]
    %v157 = vld [vmem:[#allocation2 + $0x370] sm:$0xff]
    %v158 = vld [vmem:[#allocation2 + $0x378] sm:$0xff]
    %v159 = vld [vmem:[#allocation2 + $0x380] sm:$0xff]
    %v160 = vld [vmem:[#allocation2 + $0x388] sm:$0xff]
    %v161 = vld [vmem:[#allocation2 + $0x390] sm:$0xff]
    %v162 = vld [vmem:[#allocation2 + $0x398] sm:$0xff]
    %v163 = vld [vmem:[#allocation2 + $0x3a0] sm:$0xff]
    %v164 = vld [vmem:[#allocation2 + $0x3a8] sm:$0xff]
    %v165 = vld [vmem:[#allocation2 + $0x3b0] sm:$0xff]
    %v166 = vld [vmem:[#allocation2 + $0x3b8] sm:$0xff]
    %v167 = vld [vmem:[#allocation2 + $0x3c0] sm:$0xff]
    %v168 = vld [vmem:[#allocation2 + $0x3c8] sm:$0xff]
    %v169 = vld [vmem:[#allocation2 + $0x3d0] sm:$0xff]
    %v170 = vld [vmem:[#allocation2 + $0x3d8] sm:$0xff]
    %v171 = vld [vmem:[#allocation2 + $0x3e0] sm:$0xff]
    %v172 = vld [vmem:[#allocation2 + $0x3e8] sm:$0xff]
    %v173 = vld [vmem:[#allocation2 + $0x3f0] sm:$0xff]
    %v174 = vld [vmem:[#allocation2 + $0x3f8] sm:$0xff]
    %v175 = vld [vmem:[#allocation2 + $0x400] sm:$0xff]
    %v176 = vld [vmem:[#allocation2 + $0x408] sm:$0xff]
    %v177 = vld [vmem:[#allocation2 + $0x410] sm:$0xff]
    %v178 = vld [vmem:[#allocation2 + $0x418] sm:$0xff]
    %v179 = vld [vmem:[#allocation2 + $0x420] sm:$0xff]
    %v180 = vld [vmem:[#allocation2 + $0x428] sm:$0xff]
    %v181 = vld [vmem:[#allocation2 + $0x430] sm:$0xff]
    %v182 = vld [vmem:[#allocation2 + $0x438] sm:$0xff]
    %v183 = vld [vmem:[#allocation2 + $0x440] sm:$0xff]
    %v184 = vld [vmem:[#allocation2 + $0x448] sm:$0xff]
    %v185 = vld [vmem:[#allocation2 + $0x450] sm:$0xff]
    %v186 = vld [vmem:[#allocation2 + $0x458] sm:$0xff]
    %v187 = vld [vmem:[#allocation2 + $0x460] sm:$0xff]
    %v188 = vld [vmem:[#allocation2 + $0x468] sm:$0xff]
    %v189 = vld [vmem:[#allocation2 + $0x470] sm:$0xff]
    %v190 = vld [vmem:[#allocation2 + $0x478] sm:$0xff]
    %v191 = vld [vmem:[#allocation2 + $0x480] sm:$0xff]
    %v192 = vld [vmem:[#allocation2 + $0x488] sm:$0xff]
    %v193 = vld [vmem:[#allocation2 + $0x490] sm:$0xff]
    %v194 = vld [vmem:[#allocation2 + $0x498] sm:$0xff]
    %v195 = vld [vmem:[#allocation2 + $0x4a0] sm:$0xff]
    %v196 = vld [vmem:[#allocation2 + $0x4a8] sm:$0xff]
    %v197 = vld [vmem:[#allocation2 + $0x4b0] sm:$0xff]
    %v198 = vld [vmem:[#allocation2 + $0x4b8] sm:$0xff]
    %v199 = vld [vmem:[#allocation2 + $0x4c0] sm:$0xff]
    %v200 = vld [vmem:[#allocation2 + $0x4c8] sm:$0xff]
    %v201 = vld [vmem:[#allocation2 + $0x4d0] sm:$0xff]
    %v202 = vld [vmem:[#allocation2 + $0x4d8] sm:$0xff]
    %v203 = vld [vmem:[#allocation2 + $0x4e0] sm:$0xff]
    %v204 = vld [vmem:[#allocation2 + $0x4e8] sm:$0xff]
    %v205 = vld [vmem:[#allocation2 + $0x4f0] sm:$0xff]
    %v206 = vld [vmem:[#allocation2 + $0x4f8] sm:$0xff]
    %v207 = vld [vmem:[#allocation2 + $0x500] sm:$0xff]
    %v208 = vld [vmem:[#allocation2 + $0x508] sm:$0xff]
    %v209 = vld [vmem:[#allocation2 + $0x510] sm:$0xff]
    %v210 = vld [vmem:[#allocation2 + $0x518] sm:$0xff]
    %v211 = vld [vmem:[#allocation2 + $0x520] sm:$0xff]
    %v212 = vld [vmem:[#allocation2 + $0x528] sm:$0xff]
    %v213 = vld [vmem:[#allocation2 + $0x530] sm:$0xff]
    %v214 = vld [vmem:[#allocation2 + $0x538] sm:$0xff]
    %v215 = vld [vmem:[#allocation2 + $0x540] sm:$0xff]
    %v216 = vld [vmem:[#allocation2 + $0x548] sm:$0xff]
    %v217 = vld [vmem:[#allocation2 + $0x550] sm:$0xff]
    %v218 = vld [vmem:[#allocation2 + $0x558] sm:$0xff]
    %v219 = vld [vmem:[#allocation2 + $0x560] sm:$0xff]
    %v220 = vld [vmem:[#allocation2 + $0x568] sm:$0xff]
    %v221 = vld [vmem:[#allocation2 + $0x570] sm:$0xff]
    %v222 = vld [vmem:[#allocation2 + $0x578] sm:$0xff]
    %v223 = vld [vmem:[#allocation2 + $0x580] sm:$0xff]
    %v224 = vld [vmem:[#allocation2 + $0x588] sm:$0xff]
    %v225 = vld [vmem:[#allocation2 + $0x590] sm:$0xff]
    %v226 = vld [vmem:[#allocation2 + $0x598] sm:$0xff]
    %v227 = vld [vmem:[#allocation2 + $0x5a0] sm:$0xff]
    %v228 = vld [vmem:[#allocation2 + $0x5a8] sm:$0xff]
    %v229 = vld [vmem:[#allocation2 + $0x5b0] sm:$0xff]
    %v230 = vld [vmem:[#allocation2 + $0x5b8] sm:$0xff]
    %v231 = vld [vmem:[#allocation2 + $0x5c0] sm:$0xff]
    %v232 = vld [vmem:[#allocation2 + $0x5c8] sm:$0xff]
    %v233 = vld [vmem:[#allocation2 + $0x5d0] sm:$0xff]
    %v234 = vld [vmem:[#allocation2 + $0x5d8] sm:$0xff]
    %v235 = vld [vmem:[#allocation2 + $0x5e0] sm:$0xff]
    %v236 = vld [vmem:[#allocation2 + $0x5e8] sm:$0xff]
    %v237 = vld [vmem:[#allocation2 + $0x5f0] sm:$0xff]
    %v238 = vld [vmem:[#allocation2 + $0x5f8] sm:$0xff]
    %v239 = vld [vmem:[#allocation2 + $0x600] sm:$0xff]
    %v240 = vld [vmem:[#allocation2 + $0x608] sm:$0xff]
    %v241 = vld [vmem:[#allocation2 + $0x610] sm:$0xff]
    %v242 = vld [vmem:[#allocation2 + $0x618] sm:$0xff]
    %v243 = vld [vmem:[#allocation2 + $0x620] sm:$0xff]
    %v244 = vld [vmem:[#allocation2 + $0x628] sm:$0xff]
    %v245 = vld [vmem:[#allocation2 + $0x630] sm:$0xff]
    %v246 = vld [vmem:[#allocation2 + $0x638] sm:$0xff]
    %v247 = vld [vmem:[#allocation2 + $0x640] sm:$0xff]
    %v248 = vld [vmem:[#allocation2 + $0x648] sm:$0xff]
    %v249 = vld [vmem:[#allocation2 + $0x650] sm:$0xff]
    %v250 = vld [vmem:[#allocation2 + $0x658] sm:$0xff]
    %v251 = vld [vmem:[#allocation2 + $0x660] sm:$0xff]
    %v252 = vld [vmem:[#allocation2 + $0x668] sm:$0xff]
    %v253 = vld [vmem:[#allocation2 + $0x670] sm:$0xff]
    %v254 = vld [vmem:[#allocation2 + $0x678] sm:$0xff]
    %v255 = vld [vmem:[#allocation2 + $0x680] sm:$0xff]
    %v256 = vld [vmem:[#allocation2 + $0x688] sm:$0xff]
    %v257 = vld [vmem:[#allocation2 + $0x690] sm:$0xff]
    %v258 = vld [vmem:[#allocation2 + $0x698] sm:$0xff]
    %v259 = vld [vmem:[#allocation2 + $0x6a0] sm:$0xff]
    %v260 = vld [vmem:[#allocation2 + $0x6a8] sm:$0xff]
    %v261 = vld [vmem:[#allocation2 + $0x6b0] sm:$0xff]
    %v262 = vld [vmem:[#allocation2 + $0x6b8] sm:$0xff]
    %v263 = vld [vmem:[#allocation2 + $0x6c0] sm:$0xff]
    %v264 = vld [vmem:[#allocation2 + $0x6c8] sm:$0xff]
    %v265 = vld [vmem:[#allocation2 + $0x6d0] sm:$0xff]
    %v266 = vld [vmem:[#allocation2 + $0x6d8] sm:$0xff]
    %v267 = vld [vmem:[#allocation2 + $0x6e0] sm:$0xff]
    %v268 = vld [vmem:[#allocation2 + $0x6e8] sm:$0xff]
    %v269 = vld [vmem:[#allocation2 + $0x6f0] sm:$0xff]
    %v270 = vld [vmem:[#allocation2 + $0x6f8] sm:$0xff]
    %v271 = vld [vmem:[#allocation2 + $0x700] sm:$0xff]
    %v272 = vld [vmem:[#allocation2 + $0x708] sm:$0xff]
    %v273 = vld [vmem:[#allocation2 + $0x710] sm:$0xff]
    %v274 = vld [vmem:[#allocation2 + $0x718] sm:$0xff]
    %v275 = vld [vmem:[#allocation2 + $0x720] sm:$0xff]
    %v276 = vld [vmem:[#allocation2 + $0x728] sm:$0xff]
    %v277 = vld [vmem:[#allocation2 + $0x730] sm:$0xff]
    %v278 = vld [vmem:[#allocation2 + $0x738] sm:$0xff]
    %v279 = vld [vmem:[#allocation2 + $0x740] sm:$0xff]
    %v280 = vld [vmem:[#allocation2 + $0x748] sm:$0xff]
    %v281 = vld [vmem:[#allocation2 + $0x750] sm:$0xff]
    %v282 = vld [vmem:[#allocation2 + $0x758] sm:$0xff]
    %v283 = vld [vmem:[#allocation2 + $0x760] sm:$0xff]
    %v284 = vld [vmem:[#allocation2 + $0x768] sm:$0xff]
    %v285 = vld [vmem:[#allocation2 + $0x770] sm:$0xff]
    %v286 = vld [vmem:[#allocation2 + $0x778] sm:$0xff]
    %v287 = vld [vmem:[#allocation2 + $0x780] sm:$0xff]
    %v288 = vld [vmem:[#allocation2 + $0x788] sm:$0xff]
    %v289 = vld [vmem:[#allocation2 + $0x790] sm:$0xff]
    %v290 = vld [vmem:[#allocation2 + $0x798] sm:$0xff]
    %v291 = vld [vmem:[#allocation2 + $0x7a0] sm:$0xff]
    %v292 = vld [vmem:[#allocation2 + $0x7a8] sm:$0xff]
    %v293 = vld [vmem:[#allocation2 + $0x7b0] sm:$0xff]
    %v294 = vld [vmem:[#allocation2 + $0x7b8] sm:$0xff]
    %v295 = vld [vmem:[#allocation2 + $0x7c0] sm:$0xff]
    %v296 = vld [vmem:[#allocation2 + $0x7c8] sm:$0xff]
    %v297 = vld [vmem:[#allocation2 + $0x7d0] sm:$0xff]
    %v298 = vld [vmem:[#allocation2 + $0x7d8] sm:$0xff]
    %v299 = vld [vmem:[#allocation2 + $0x7e0] sm:$0xff]
    %v300 = vld [vmem:[#allocation2 + $0x7e8] sm:$0xff]
    %v301 = vld [vmem:[#allocation2 + $0x7f0] sm:$0xff]
    %v302 = vld [vmem:[#allocation2 + $0x7f8] sm:$0xff]
    %v303 = vld [vmem:[%s2] sm:$0xf]
    %v305 = vperm.slane %v303, 0
    %v306 = vperm.slane %v303, 1
    %v307 = vperm.slane %v303, 2
    %v308 = vperm.slane %v303, 3
    %313 = vmatpush.msra.mxu0 %v107
    %314 = vmatpush.msra.mxu0 %v103
    %315 = vmatpush.msra.mxu0 %v99
    %316 = vmatpush.msra.mxu0 %v95
    %317 = vmatpush.msra.mxu0 %v91
    %318 = vmatpush.msra.mxu0 %v87
    %319 = vmatpush.msra.mxu0 %v83
    %320 = vmatpush.msra.mxu0 %v79
    %321 = vmatpush.msra.mxu0 %v75
    %322 = vmatpush.msra.mxu0 %v71
    %323 = vmatpush.msra.mxu0 %v67
    %324 = vmatpush.msra.mxu0 %v63
    %325 = vmatpush.msra.mxu0 %v59
    %326 = vmatpush.msra.mxu0 %v55
    %327 = vmatpush.msra.mxu0 %v51
    %328 = vmatpush.msra.mxu0 %v47
    %329 = vmatmul.f32.gmra.mxu0 %v31
    %v330 = vpop.f32.mrf.mxu0
    %v331 = vadd.f32 %v305, %v330
    %332 = vmatmul.f32.gmra.mxu0 %v35
    %v333 = vpop.f32.mrf.mxu0
    %v334 = vadd.f32 %v305, %v333
    %335 = vmatmul.f32.gmra.mxu0 %v39
    %v336 = vpop.f32.mrf.mxu0
    %v337 = vadd.f32 %v305, %v336
    %338 = vmatmul.f32.gmra.mxu0 %v43
    %v339 = vpop.f32.mrf.mxu0
    %v340 = vadd.f32 %v305, %v339
    %341 = vdwg.mxu0
    %342 = vmatpush.msra.mxu0 %v171
    %343 = vmatpush.msra.mxu0 %v167
    %344 = vmatpush.msra.mxu0 %v163
    %345 = vmatpush.msra.mxu0 %v159
    %346 = vmatpush.msra.mxu0 %v155
    %347 = vmatpush.msra.mxu0 %v151
    %348 = vmatpush.msra.mxu0 %v147
    %349 = vmatpush.msra.mxu0 %v143
    %350 = vmatpush.msra.mxu0 %v139
    %351 = vmatpush.msra.mxu0 %v135
    %352 = vmatpush.msra.mxu0 %v131
    %353 = vmatpush.msra.mxu0 %v127
    %354 = vmatpush.msra.mxu0 %v123
    %355 = vmatpush.msra.mxu0 %v119
    %356 = vmatpush.msra.mxu0 %v115
    %357 = vmatpush.msra.mxu0 %v111
    %358 = vmatmul.f32.gmra.mxu0 %v32
    %v359 = vpop.f32.mrf.mxu0
    %v360 = vadd.f32 %v331, %v359
    %361 = vmatmul.f32.gmra.mxu0 %v36
    %v362 = vpop.f32.mrf.mxu0
    %v363 = vadd.f32 %v334, %v362
    %364 = vmatmul.f32.gmra.mxu0 %v40
    %v365 = vpop.f32.mrf.mxu0
    %v366 = vadd.f32 %v337, %v365
    %367 = vmatmul.f32.gmra.mxu0 %v44
    %v368 = vpop.f32.mrf.mxu0
    %v369 = vadd.f32 %v340, %v368
    %370 = vdwg.mxu0
    %371 = vmatpush.msra.mxu0 %v235
    %372 = vmatpush.msra.mxu0 %v231
    %373 = vmatpush.msra.mxu0 %v227
    %374 = vmatpush.msra.mxu0 %v223
    %375 = vmatpush.msra.mxu0 %v219
    %376 = vmatpush.msra.mxu0 %v215
    %377 = vmatpush.msra.mxu0 %v211
    %378 = vmatpush.msra.mxu0 %v207
    %379 = vmatpush.msra.mxu0 %v203
    %380 = vmatpush.msra.mxu0 %v199
    %381 = vmatpush.msra.mxu0 %v195
    %382 = vmatpush.msra.mxu0 %v191
    %383 = vmatpush.msra.mxu0 %v187
    %384 = vmatpush.msra.mxu0 %v183
    %385 = vmatpush.msra.mxu0 %v179
    %386 = vmatpush.msra.mxu0 %v175
    %387 = vmatmul.f32.gmra.mxu0 %v33
    %v388 = vpop.f32.mrf.mxu0
    %v389 = vadd.f32 %v360, %v388
    %390 = vmatmul.f32.gmra.mxu0 %v37
    %v391 = vpop.f32.mrf.mxu0
    %v392 = vadd.f32 %v363, %v391
    %393 = vmatmul.f32.gmra.mxu0 %v41
    %v394 = vpop.f32.mrf.mxu0
    %v395 = vadd.f32 %v366, %v394
    %396 = vmatmul.f32.gmra.mxu0 %v45
    %v397 = vpop.f32.mrf.mxu0
    %v398 = vadd.f32 %v369, %v397
    %399 = vdwg.mxu0
    %400 = vmatpush.msra.mxu0 %v299
    %401 = vmatpush.msra.mxu0 %v295
    %402 = vmatpush.msra.mxu0 %v291
    %403 = vmatpush.msra.mxu0 %v287
    %404 = vmatpush.msra.mxu0 %v283
    %405 = vmatpush.msra.mxu0 %v279
    %406 = vmatpush.msra.mxu0 %v275
    %407 = vmatpush.msra.mxu0 %v271
    %408 = vmatpush.msra.mxu0 %v267
    %409 = vmatpush.msra.mxu0 %v263
    %410 = vmatpush.msra.mxu0 %v259
    %411 = vmatpush.msra.mxu0 %v255
    %412 = vmatpush.msra.mxu0 %v251
    %413 = vmatpush.msra.mxu0 %v247
    %414 = vmatpush.msra.mxu0 %v243
    %415 = vmatpush.msra.mxu0 %v239
    %416 = vmatmul.f32.gmra.mxu0 %v34
    %v417 = vpop.f32.mrf.mxu0
    %v418 = vadd.f32 %v389, %v417
    %419 = vmatmul.f32.gmra.mxu0 %v38
    %v420 = vpop.f32.mrf.mxu0
    %v421 = vadd.f32 %v392, %v420
    %422 = vmatmul.f32.gmra.mxu0 %v42
    %v423 = vpop.f32.mrf.mxu0
    %v424 = vadd.f32 %v395, %v423
    %425 = vmatmul.f32.gmra.mxu0 %v46
    %v426 = vpop.f32.mrf.mxu0
    %v427 = vadd.f32 %v398, %v426
    %428 = vdwg.mxu0
    %429 = vmatpush.msra.mxu0 %v108
    %430 = vmatpush.msra.mxu0 %v104
    %431 = vmatpush.msra.mxu0 %v100
    %432 = vmatpush.msra.mxu0 %v96
    %433 = vmatpush.msra.mxu0 %v92
    %434 = vmatpush.msra.mxu0 %v88
    %435 = vmatpush.msra.mxu0 %v84
    %436 = vmatpush.msra.mxu0 %v80
    %437 = vmatpush.msra.mxu0 %v76
    %438 = vmatpush.msra.mxu0 %v72
    %439 = vmatpush.msra.mxu0 %v68
    %440 = vmatpush.msra.mxu0 %v64
    %441 = vmatpush.msra.mxu0 %v60
    %442 = vmatpush.msra.mxu0 %v56
    %443 = vmatpush.msra.mxu0 %v52
    %444 = vmatpush.msra.mxu0 %v48
    %445 = vmatmul.f32.gmra.mxu0 %v31
    %v446 = vpop.f32.mrf.mxu0
    %v447 = vadd.f32 %v306, %v446
    %448 = vmatmul.f32.gmra.mxu0 %v35
    %v449 = vpop.f32.mrf.mxu0
    %v450 = vadd.f32 %v306, %v449
    %451 = vmatmul.f32.gmra.mxu0 %v39
    %v452 = vpop.f32.mrf.mxu0
    %v453 = vadd.f32 %v306, %v452
    %454 = vmatmul.f32.gmra.mxu0 %v43
    %v455 = vpop.f32.mrf.mxu0
    %v456 = vadd.f32 %v306, %v455
    %457 = vdwg.mxu0
    %458 = vmatpush.msra.mxu0 %v172
    %459 = vmatpush.msra.mxu0 %v168
    %460 = vmatpush.msra.mxu0 %v164
    %461 = vmatpush.msra.mxu0 %v160
    %462 = vmatpush.msra.mxu0 %v156
    %463 = vmatpush.msra.mxu0 %v152
    %464 = vmatpush.msra.mxu0 %v148
    %465 = vmatpush.msra.mxu0 %v144
    %466 = vmatpush.msra.mxu0 %v140
    %467 = vmatpush.msra.mxu0 %v136
    %468 = vmatpush.msra.mxu0 %v132
    %469 = vmatpush.msra.mxu0 %v128
    %470 = vmatpush.msra.mxu0 %v124
    %471 = vmatpush.msra.mxu0 %v120
    %472 = vmatpush.msra.mxu0 %v116
    %473 = vmatpush.msra.mxu0 %v112
    %474 = vmatmul.f32.gmra.mxu0 %v32
    %v475 = vpop.f32.mrf.mxu0
    %v476 = vadd.f32 %v447, %v475
    %477 = vmatmul.f32.gmra.mxu0 %v36
    %v478 = vpop.f32.mrf.mxu0
    %v479 = vadd.f32 %v450, %v478
    %480 = vmatmul.f32.gmra.mxu0 %v40
    %v481 = vpop.f32.mrf.mxu0
    %v482 = vadd.f32 %v453, %v481
    %483 = vmatmul.f32.gmra.mxu0 %v44
    %v484 = vpop.f32.mrf.mxu0
    %v485 = vadd.f32 %v456, %v484
    %486 = vdwg.mxu0
    %487 = vmatpush.msra.mxu0 %v236
    %488 = vmatpush.msra.mxu0 %v232
    %489 = vmatpush.msra.mxu0 %v228
    %490 = vmatpush.msra.mxu0 %v224
    %491 = vmatpush.msra.mxu0 %v220
    %492 = vmatpush.msra.mxu0 %v216
    %493 = vmatpush.msra.mxu0 %v212
    %494 = vmatpush.msra.mxu0 %v208
    %495 = vmatpush.msra.mxu0 %v204
    %496 = vmatpush.msra.mxu0 %v200
    %497 = vmatpush.msra.mxu0 %v196
    %498 = vmatpush.msra.mxu0 %v192
    %499 = vmatpush.msra.mxu0 %v188
    %500 = vmatpush.msra.mxu0 %v184
    %501 = vmatpush.msra.mxu0 %v180
    %502 = vmatpush.msra.mxu0 %v176
    %503 = vmatmul.f32.gmra.mxu0 %v33
    %v504 = vpop.f32.mrf.mxu0
    %v505 = vadd.f32 %v476, %v504
    %506 = vmatmul.f32.gmra.mxu0 %v37
    %v507 = vpop.f32.mrf.mxu0
    %v508 = vadd.f32 %v479, %v507
    %509 = vmatmul.f32.gmra.mxu0 %v41
    %v510 = vpop.f32.mrf.mxu0
    %v511 = vadd.f32 %v482, %v510
    %512 = vmatmul.f32.gmra.mxu0 %v45
    %v513 = vpop.f32.mrf.mxu0
    %v514 = vadd.f32 %v485, %v513
    %515 = vdwg.mxu0
    %516 = vmatpush.msra.mxu0 %v300
    %517 = vmatpush.msra.mxu0 %v296
    %518 = vmatpush.msra.mxu0 %v292
    %519 = vmatpush.msra.mxu0 %v288
    %520 = vmatpush.msra.mxu0 %v284
    %521 = vmatpush.msra.mxu0 %v280
    %522 = vmatpush.msra.mxu0 %v276
    %523 = vmatpush.msra.mxu0 %v272
    %524 = vmatpush.msra.mxu0 %v268
    %525 = vmatpush.msra.mxu0 %v264
    %526 = vmatpush.msra.mxu0 %v260
    %527 = vmatpush.msra.mxu0 %v256
    %528 = vmatpush.msra.mxu0 %v252
    %529 = vmatpush.msra.mxu0 %v248
    %530 = vmatpush.msra.mxu0 %v244
    %531 = vmatpush.msra.mxu0 %v240
    %532 = vmatmul.f32.gmra.mxu0 %v34
    %v533 = vpop.f32.mrf.mxu0
    %v534 = vadd.f32 %v505, %v533
    %535 = vmatmul.f32.gmra.mxu0 %v38
    %v536 = vpop.f32.mrf.mxu0
    %v537 = vadd.f32 %v508, %v536
    %538 = vmatmul.f32.gmra.mxu0 %v42
    %v539 = vpop.f32.mrf.mxu0
    %v540 = vadd.f32 %v511, %v539
    %541 = vmatmul.f32.gmra.mxu0 %v46
    %v542 = vpop.f32.mrf.mxu0
    %v543 = vadd.f32 %v514, %v542
    %544 = vdwg.mxu0
    %545 = vmatpush.msra.mxu0 %v109
    %546 = vmatpush.msra.mxu0 %v105
    %547 = vmatpush.msra.mxu0 %v101
    %548 = vmatpush.msra.mxu0 %v97
    %549 = vmatpush.msra.mxu0 %v93
    %550 = vmatpush.msra.mxu0 %v89
    %551 = vmatpush.msra.mxu0 %v85
    %552 = vmatpush.msra.mxu0 %v81
    %553 = vmatpush.msra.mxu0 %v77
    %554 = vmatpush.msra.mxu0 %v73
    %555 = vmatpush.msra.mxu0 %v69
    %556 = vmatpush.msra.mxu0 %v65
    %557 = vmatpush.msra.mxu0 %v61
    %558 = vmatpush.msra.mxu0 %v57
    %559 = vmatpush.msra.mxu0 %v53
    %560 = vmatpush.msra.mxu0 %v49
    %561 = vmatmul.f32.gmra.mxu0 %v31
    %v562 = vpop.f32.mrf.mxu0
    %v563 = vadd.f32 %v307, %v562
    %564 = vmatmul.f32.gmra.mxu0 %v35
    %v565 = vpop.f32.mrf.mxu0
    %v566 = vadd.f32 %v307, %v565
    %567 = vmatmul.f32.gmra.mxu0 %v39
    %v568 = vpop.f32.mrf.mxu0
    %v569 = vadd.f32 %v307, %v568
    %570 = vmatmul.f32.gmra.mxu0 %v43
    %v571 = vpop.f32.mrf.mxu0
    %v572 = vadd.f32 %v307, %v571
    %573 = vdwg.mxu0
    %574 = vmatpush.msra.mxu0 %v173
    %575 = vmatpush.msra.mxu0 %v169
    %576 = vmatpush.msra.mxu0 %v165
    %577 = vmatpush.msra.mxu0 %v161
    %578 = vmatpush.msra.mxu0 %v157
    %579 = vmatpush.msra.mxu0 %v153
    %580 = vmatpush.msra.mxu0 %v149
    %581 = vmatpush.msra.mxu0 %v145
    %582 = vmatpush.msra.mxu0 %v141
    %583 = vmatpush.msra.mxu0 %v137
    %584 = vmatpush.msra.mxu0 %v133
    %585 = vmatpush.msra.mxu0 %v129
    %586 = vmatpush.msra.mxu0 %v125
    %587 = vmatpush.msra.mxu0 %v121
    %588 = vmatpush.msra.mxu0 %v117
    %589 = vmatpush.msra.mxu0 %v113
    %590 = vmatmul.f32.gmra.mxu0 %v32
    %v591 = vpop.f32.mrf.mxu0
    %v592 = vadd.f32 %v563, %v591
    %593 = vmatmul.f32.gmra.mxu0 %v36
    %v594 = vpop.f32.mrf.mxu0
    %v595 = vadd.f32 %v566, %v594
    %596 = vmatmul.f32.gmra.mxu0 %v40
    %v597 = vpop.f32.mrf.mxu0
    %v598 = vadd.f32 %v569, %v597
    %599 = vmatmul.f32.gmra.mxu0 %v44
    %v600 = vpop.f32.mrf.mxu0
    %v601 = vadd.f32 %v572, %v600
    %602 = vdwg.mxu0
    %603 = vmatpush.msra.mxu0 %v237
    %604 = vmatpush.msra.mxu0 %v233
    %605 = vmatpush.msra.mxu0 %v229
    %606 = vmatpush.msra.mxu0 %v225
    %607 = vmatpush.msra.mxu0 %v221
    %608 = vmatpush.msra.mxu0 %v217
    %609 = vmatpush.msra.mxu0 %v213
    %610 = vmatpush.msra.mxu0 %v209
    %611 = vmatpush.msra.mxu0 %v205
    %612 = vmatpush.msra.mxu0 %v201
    %613 = vmatpush.msra.mxu0 %v197
    %614 = vmatpush.msra.mxu0 %v193
    %615 = vmatpush.msra.mxu0 %v189
    %616 = vmatpush.msra.mxu0 %v185
    %617 = vmatpush.msra.mxu0 %v181
    %618 = vmatpush.msra.mxu0 %v177
    %619 = vmatmul.f32.gmra.mxu0 %v33
    %v620 = vpop.f32.mrf.mxu0
    %v621 = vadd.f32 %v592, %v620
    %622 = vmatmul.f32.gmra.mxu0 %v37
    %v623 = vpop.f32.mrf.mxu0
    %v624 = vadd.f32 %v595, %v623
    %625 = vmatmul.f32.gmra.mxu0 %v41
    %v626 = vpop.f32.mrf.mxu0
    %v627 = vadd.f32 %v598, %v626
    %628 = vmatmul.f32.gmra.mxu0 %v45
    %v629 = vpop.f32.mrf.mxu0
    %v630 = vadd.f32 %v601, %v629
    %631 = vdwg.mxu0
    %632 = vmatpush.msra.mxu0 %v301
    %633 = vmatpush.msra.mxu0 %v297
    %634 = vmatpush.msra.mxu0 %v293
    %635 = vmatpush.msra.mxu0 %v289
    %636 = vmatpush.msra.mxu0 %v285
    %637 = vmatpush.msra.mxu0 %v281
    %638 = vmatpush.msra.mxu0 %v277
    %639 = vmatpush.msra.mxu0 %v273
    %640 = vmatpush.msra.mxu0 %v269
    %641 = vmatpush.msra.mxu0 %v265
    %642 = vmatpush.msra.mxu0 %v261
    %643 = vmatpush.msra.mxu0 %v257
    %644 = vmatpush.msra.mxu0 %v253
    %645 = vmatpush.msra.mxu0 %v249
    %646 = vmatpush.msra.mxu0 %v245
    %647 = vmatpush.msra.mxu0 %v241
    %648 = vmatmul.f32.gmra.mxu0 %v34
    %v649 = vpop.f32.mrf.mxu0
    %v650 = vadd.f32 %v621, %v649
    %651 = vmatmul.f32.gmra.mxu0 %v38
    %v652 = vpop.f32.mrf.mxu0
    %v653 = vadd.f32 %v624, %v652
    %654 = vmatmul.f32.gmra.mxu0 %v42
    %v655 = vpop.f32.mrf.mxu0
    %v656 = vadd.f32 %v627, %v655
    %657 = vmatmul.f32.gmra.mxu0 %v46
    %v658 = vpop.f32.mrf.mxu0
    %v659 = vadd.f32 %v630, %v658
    %660 = vdwg.mxu0
    %661 = vmatpush.msra.mxu0 %v110
    %662 = vmatpush.msra.mxu0 %v106
    %663 = vmatpush.msra.mxu0 %v102
    %664 = vmatpush.msra.mxu0 %v98
    %665 = vmatpush.msra.mxu0 %v94
    %666 = vmatpush.msra.mxu0 %v90
    %667 = vmatpush.msra.mxu0 %v86
    %668 = vmatpush.msra.mxu0 %v82
    %669 = vmatpush.msra.mxu0 %v78
    %670 = vmatpush.msra.mxu0 %v74
    %671 = vmatpush.msra.mxu0 %v70
    %672 = vmatpush.msra.mxu0 %v66
    %673 = vmatpush.msra.mxu0 %v62
    %674 = vmatpush.msra.mxu0 %v58
    %675 = vmatpush.msra.mxu0 %v54
    %676 = vmatpush.msra.mxu0 %v50
    %677 = vmatmul.f32.gmra.mxu0 %v31
    %v678 = vpop.f32.mrf.mxu0
    %v679 = vadd.f32 %v308, %v678
    %680 = vmatmul.f32.gmra.mxu0 %v35
    %v681 = vpop.f32.mrf.mxu0
    %v682 = vadd.f32 %v308, %v681
    %683 = vmatmul.f32.gmra.mxu0 %v39
    %v684 = vpop.f32.mrf.mxu0
    %v685 = vadd.f32 %v308, %v684
    %686 = vmatmul.f32.gmra.mxu0 %v43
    %v687 = vpop.f32.mrf.mxu0
    %v688 = vadd.f32 %v308, %v687
    %689 = vdwg.mxu0
    %690 = vmatpush.msra.mxu0 %v174
    %691 = vmatpush.msra.mxu0 %v170
    %692 = vmatpush.msra.mxu0 %v166
    %693 = vmatpush.msra.mxu0 %v162
    %694 = vmatpush.msra.mxu0 %v158
    %695 = vmatpush.msra.mxu0 %v154
    %696 = vmatpush.msra.mxu0 %v150
    %697 = vmatpush.msra.mxu0 %v146
    %698 = vmatpush.msra.mxu0 %v142
    %699 = vmatpush.msra.mxu0 %v138
    %700 = vmatpush.msra.mxu0 %v134
    %701 = vmatpush.msra.mxu0 %v130
    %702 = vmatpush.msra.mxu0 %v126
    %703 = vmatpush.msra.mxu0 %v122
    %704 = vmatpush.msra.mxu0 %v118
    %705 = vmatpush.msra.mxu0 %v114
    %706 = vmatmul.f32.gmra.mxu0 %v32
    %v707 = vpop.f32.mrf.mxu0
    %v708 = vadd.f32 %v679, %v707
    %709 = vmatmul.f32.gmra.mxu0 %v36
    %v710 = vpop.f32.mrf.mxu0
    %v711 = vadd.f32 %v682, %v710
    %712 = vmatmul.f32.gmra.mxu0 %v40
    %v713 = vpop.f32.mrf.mxu0
    %v714 = vadd.f32 %v685, %v713
    %715 = vmatmul.f32.gmra.mxu0 %v44
    %v716 = vpop.f32.mrf.mxu0
    %v717 = vadd.f32 %v688, %v716
    %718 = vdwg.mxu0
    %719 = vmatpush.msra.mxu0 %v238
    %720 = vmatpush.msra.mxu0 %v234
    %721 = vmatpush.msra.mxu0 %v230
    %722 = vmatpush.msra.mxu0 %v226
    %723 = vmatpush.msra.mxu0 %v222
    %724 = vmatpush.msra.mxu0 %v218
    %725 = vmatpush.msra.mxu0 %v214
    %726 = vmatpush.msra.mxu0 %v210
    %727 = vmatpush.msra.mxu0 %v206
    %728 = vmatpush.msra.mxu0 %v202
    %729 = vmatpush.msra.mxu0 %v198
    %730 = vmatpush.msra.mxu0 %v194
    %731 = vmatpush.msra.mxu0 %v190
    %732 = vmatpush.msra.mxu0 %v186
    %733 = vmatpush.msra.mxu0 %v182
    %734 = vmatpush.msra.mxu0 %v178
    %735 = vmatmul.f32.gmra.mxu0 %v33
    %v736 = vpop.f32.mrf.mxu0
    %v737 = vadd.f32 %v708, %v736
    %738 = vmatmul.f32.gmra.mxu0 %v37
    %v739 = vpop.f32.mrf.mxu0
    %v740 = vadd.f32 %v711, %v739
    %741 = vmatmul.f32.gmra.mxu0 %v41
    %v742 = vpop.f32.mrf.mxu0
    %v743 = vadd.f32 %v714, %v742
    %744 = vmatmul.f32.gmra.mxu0 %v45
    %v745 = vpop.f32.mrf.mxu0
    %v746 = vadd.f32 %v717, %v745
    %747 = vdwg.mxu0
    %748 = vmatpush.msra.mxu0 %v302
    %749 = vmatpush.msra.mxu0 %v298
    %750 = vmatpush.msra.mxu0 %v294
    %751 = vmatpush.msra.mxu0 %v290
    %752 = vmatpush.msra.mxu0 %v286
    %753 = vmatpush.msra.mxu0 %v282
    %754 = vmatpush.msra.mxu0 %v278
    %755 = vmatpush.msra.mxu0 %v274
    %756 = vmatpush.msra.mxu0 %v270
    %757 = vmatpush.msra.mxu0 %v266
    %758 = vmatpush.msra.mxu0 %v262
    %759 = vmatpush.msra.mxu0 %v258
    %760 = vmatpush.msra.mxu0 %v254
    %761 = vmatpush.msra.mxu0 %v250
    %762 = vmatpush.msra.mxu0 %v246
    %763 = vmatpush.msra.mxu0 %v242
    %764 = vmatmul.f32.gmra.mxu0 %v34
    %v765 = vpop.f32.mrf.mxu0
    %v766 = vadd.f32 %v737, %v765
    %767 = vmatmul.f32.gmra.mxu0 %v38
    %v768 = vpop.f32.mrf.mxu0
    %v769 = vadd.f32 %v740, %v768
    %770 = vmatmul.f32.gmra.mxu0 %v42
    %v771 = vpop.f32.mrf.mxu0
    %v772 = vadd.f32 %v743, %v771
    %773 = vmatmul.f32.gmra.mxu0 %v46
    %v774 = vpop.f32.mrf.mxu0
    %v775 = vadd.f32 %v746, %v774
    %776 = vdwg.mxu0
    %777 = vst [vmem:[#allocation5] sm:$0xff] %v418
    %778 = vst [vmem:[#allocation5 + $0x8] sm:$0xff] %v534
    %779 = vst [vmem:[#allocation5 + $0x10] sm:$0xff] %v650
    %780 = vst [vmem:[#allocation5 + $0x18] sm:$0xff] %v766
    %781 = vst [vmem:[#allocation5 + $0x20] sm:$0xff] %v421
    %782 = vst [vmem:[#allocation5 + $0x28] sm:$0xff] %v537
    %783 = vst [vmem:[#allocation5 + $0x30] sm:$0xff] %v653
    %784 = vst [vmem:[#allocation5 + $0x38] sm:$0xff] %v769
    %785 = vst [vmem:[#allocation5 + $0x40] sm:$0xff] %v424
    %786 = vst [vmem:[#allocation5 + $0x48] sm:$0xff] %v540
    %787 = vst [vmem:[#allocation5 + $0x50] sm:$0xff] %v656
    %788 = vst [vmem:[#allocation5 + $0x58] sm:$0xff] %v772
    %789 = vst [vmem:[#allocation5 + $0x60] sm:$0xff] %v427
    %790 = vst [vmem:[#allocation5 + $0x68] sm:$0xff] %v543
    %791 = vst [vmem:[#allocation5 + $0x70] sm:$0xff] %v659
    %792 = vst [vmem:[#allocation5 + $0x78] sm:$0xff] %v775
    // Predicated region
    $region18: #{multihead2_forward.9} parent=1 // pred_check
      _
    $region19: #{multihead2_forward.9} parent=1 // pred_check_branch
      %794 = sbr.rel (0) target = $region21
    $region20: #{multihead2_forward.9} parent=1 // pred_region
      %796 = vsyncadd [#allocation4], 0
      %s797 = sshll.u32 [#allocation5], 4
      %s798 = int_to_ptr.vmem [resolvable:$true] %s797
      %s799 = sshll.u32 %s3, 4
      %s800 = int_to_ptr.hbm [resolvable:$true] %s799
      %805 = dma.vmem_to_hbm [thread:$0]  %s798, 2048, %s800, [#allocation4], 512, 512, 32
    $region21: #{multihead2_forward.9} parent=1 // pred_fallthru
      _
    // Predicated region
    $region22: #{multihead2_forward.9} parent=1 // pred_check
      _
    $region23: #{multihead2_forward.9} parent=1 // pred_check_branch
      %807 = sbr.rel (0) target = $region25
    $region24: #{multihead2_forward.9} parent=1 // pred_region
      %809 = dma.done [#allocation4], 2048
    $region25: #{multihead2_forward.9} parent=1 // pred_fallthru
      _
    %810 = vsyncpa [#allocation3], 1
    %811 = vsyncpa [#allocation4], 1

// kernel: multihead2_forward.6
$region0: #{multihead2_forward.6}
  #allocation0 [shape = 'u32[]', space=smem, size = 0x4, offset = 0x4, fixed_abs, tag = 'smem constant byte address 0x4 - core index']
  #allocation1 [shape = 'u32[72,128]{1,0:T(1,128)}', space=vmem, size = 0x9000, scoped, tag = 'internal scratch']
  %s0 = inlined_call_operand.hbm [shape: f32[32,512], index: 0, kind: input, shape index: {}]
  %s1 = inlined_call_operand.hbm [shape: f32[512,512], index: 1, kind: input, shape index: {}]
  %s2 = inlined_call_operand.vmem [shape: f32[1,512], index: 2, kind: input, shape index: {}]
  %s3 = inlined_call_operand.vmem [shape: f32[32,512], index: 3, kind: output, shape index: {}]
  %s4 = sld [smem:[#allocation0]]
  $region30: #{multihead2_forward.6} parent=0
    _
  %s6 = ssub.s32 1, %s4
  %s7 = scalar_select 0, %s6, %s4
  $region1: #{multihead2_forward.6} parent=0
    #allocation2 [shape = 'u8[65536]{0}', space=vmem, size = 0x10000, scoped, tag = 'input window, operand 0, single buffered']
    #allocation3 [shape = 's32[1]{0}', space=sflag, size = 0x4, scoped, tag = 'scoped memory for multihead2_forward.6']
    #allocation4 [shape = 'u8[1048576]{0}', space=vmem, size = 0x100000, scoped, tag = 'input window, operand 1, single buffered']
    #allocation5 [shape = 's32[1]{0}', space=sflag, size = 0x4, scoped, tag = 'scoped memory for multihead2_forward.6']
    %8 = vsyncpa [#allocation3], 0
    %9 = vsyncpa [#allocation5], 0
    // Predicated region
    $region2: #{multihead2_forward.6} parent=1 // pred_check
      _
    $region3: #{multihead2_forward.6} parent=1 // pred_check_branch
      %11 = sbr.rel (0) target = $region5
    $region4: #{multihead2_forward.6} parent=1 // pred_region
      %13 = vsyncadd [#allocation3], 0
      %s14 = sshll.u32 %s0, 4
      %s15 = int_to_ptr.hbm [resolvable:$true] %s14
      %s16 = sshll.u32 [#allocation2], 4
      %s17 = int_to_ptr.vmem [resolvable:$true] %s16
      %22 = dma.hbm_to_vmem [thread:$0]  %s15, 2048, %s17, [#allocation3], 512, 512, 32
    $region5: #{multihead2_forward.6} parent=1 // pred_fallthru
      _
    // Predicated region
    $region6: #{multihead2_forward.6} parent=1 // pred_check
      _
    $region7: #{multihead2_forward.6} parent=1 // pred_check_branch
      %24 = sbr.rel (0) target = $region9
    $region8: #{multihead2_forward.6} parent=1 // pred_region
      %26 = vsyncadd [#allocation5], 0
      %s27 = sshll.u32 %s1, 4
      %s28 = int_to_ptr.hbm [resolvable:$true] %s27
      %s29 = sshll.u32 [#allocation4], 4
      %s30 = int_to_ptr.vmem [resolvable:$true] %s29
      %35 = dma.hbm_to_vmem [thread:$0]  %s28, 32768, %s30, [#allocation5], 512, 512, 32
    $region9: #{multihead2_forward.6} parent=1 // pred_fallthru
      _
    // Predicated region
    $region10: #{multihead2_forward.6} parent=1 // pred_check
      _
    $region11: #{multihead2_forward.6} parent=1 // pred_check_branch
      %37 = sbr.rel (0) target = $region13
    $region12: #{multihead2_forward.6} parent=1 // pred_region
      _
    $region13: #{multihead2_forward.6} parent=1 // pred_fallthru
      _
    // Predicated region
    $region14: #{multihead2_forward.6} parent=1 // pred_check
      _
    $region15: #{multihead2_forward.6} parent=1 // pred_check_branch
      %39 = sbr.rel (0) target = $region17
    $region16: #{multihead2_forward.6} parent=1 // pred_region
      %41 = dma.done [#allocation3], 2048
    $region17: #{multihead2_forward.6} parent=1 // pred_fallthru
      _
    // Predicated region
    $region18: #{multihead2_forward.6} parent=1 // pred_check
      _
    $region19: #{multihead2_forward.6} parent=1 // pred_check_branch
      %43 = sbr.rel (0) target = $region21
    $region20: #{multihead2_forward.6} parent=1 // pred_region
      %45 = dma.done [#allocation5], 32768
    $region21: #{multihead2_forward.6} parent=1 // pred_fallthru
      _
    %v46 = vld [vmem:[#allocation2] sm:$0xff]
    %v47 = vld [vmem:[#allocation2 + $0x8] sm:$0xff]
    %v48 = vld [vmem:[#allocation2 + $0x10] sm:$0xff]
    %v49 = vld [vmem:[#allocation2 + $0x18] sm:$0xff]
    %v50 = vld [vmem:[#allocation2 + $0x20] sm:$0xff]
    %v51 = vld [vmem:[#allocation2 + $0x28] sm:$0xff]
    %v52 = vld [vmem:[#allocation2 + $0x30] sm:$0xff]
    %v53 = vld [vmem:[#allocation2 + $0x38] sm:$0xff]
    %v54 = vld [vmem:[#allocation2 + $0x40] sm:$0xff]
    %v55 = vld [vmem:[#allocation2 + $0x48] sm:$0xff]
    %v56 = vld [vmem:[#allocation2 + $0x50] sm:$0xff]
    %v57 = vld [vmem:[#allocation2 + $0x58] sm:$0xff]
    %v58 = vld [vmem:[#allocation2 + $0x60] sm:$0xff]
    %v59 = vld [vmem:[#allocation2 + $0x68] sm:$0xff]
    %v60 = vld [vmem:[#allocation2 + $0x70] sm:$0xff]
    %v61 = vld [vmem:[#allocation2 + $0x78] sm:$0xff]
    %v62 = vld [vmem:[#allocation4] sm:$0xff]
    %v63 = vld [vmem:[#allocation4 + $0x8] sm:$0xff]
    %v64 = vld [vmem:[#allocation4 + $0x10] sm:$0xff]
    %v65 = vld [vmem:[#allocation4 + $0x18] sm:$0xff]
    %v66 = vld [vmem:[#allocation4 + $0x20] sm:$0xff]
    %v67 = vld [vmem:[#allocation4 + $0x28] sm:$0xff]
    %v68 = vld [vmem:[#allocation4 + $0x30] sm:$0xff]
    %v69 = vld [vmem:[#allocation4 + $0x38] sm:$0xff]
    %v70 = vld [vmem:[#allocation4 + $0x40] sm:$0xff]
    %v71 = vld [vmem:[#allocation4 + $0x48] sm:$0xff]
    %v72 = vld [vmem:[#allocation4 + $0x50] sm:$0xff]
    %v73 = vld [vmem:[#allocation4 + $0x58] sm:$0xff]
    %v74 = vld [vmem:[#allocation4 + $0x60] sm:$0xff]
    %v75 = vld [vmem:[#allocation4 + $0x68] sm:$0xff]
    %v76 = vld [vmem:[#allocation4 + $0x70] sm:$0xff]
    %v77 = vld [vmem:[#allocation4 + $0x78] sm:$0xff]
    %v78 = vld [vmem:[#allocation4 + $0x80] sm:$0xff]
    %v79 = vld [vmem:[#allocation4 + $0x88] sm:$0xff]
    %v80 = vld [vmem:[#allocation4 + $0x90] sm:$0xff]
    %v81 = vld [vmem:[#allocation4 + $0x98] sm:$0xff]
    %v82 = vld [vmem:[#allocation4 + $0xa0] sm:$0xff]
    %v83 = vld [vmem:[#allocation4 + $0xa8] sm:$0xff]
    %v84 = vld [vmem:[#allocation4 + $0xb0] sm:$0xff]
    %v85 = vld [vmem:[#allocation4 + $0xb8] sm:$0xff]
    %v86 = vld [vmem:[#allocation4 + $0xc0] sm:$0xff]
    %v87 = vld [vmem:[#allocation4 + $0xc8] sm:$0xff]
    %v88 = vld [vmem:[#allocation4 + $0xd0] sm:$0xff]
    %v89 = vld [vmem:[#allocation4 + $0xd8] sm:$0xff]
    %v90 = vld [vmem:[#allocation4 + $0xe0] sm:$0xff]
    %v91 = vld [vmem:[#allocation4 + $0xe8] sm:$0xff]
    %v92 = vld [vmem:[#allocation4 + $0xf0] sm:$0xff]
    %v93 = vld [vmem:[#allocation4 + $0xf8] sm:$0xff]
    %v94 = vld [vmem:[#allocation4 + $0x100] sm:$0xff]
    %v95 = vld [vmem:[#allocation4 + $0x108] sm:$0xff]
    %v96 = vld [vmem:[#allocation4 + $0x110] sm:$0xff]
    %v97 = vld [vmem:[#allocation4 + $0x118] sm:$0xff]
    %v98 = vld [vmem:[#allocation4 + $0x120] sm:$0xff]
    %v99 = vld [vmem:[#allocation4 + $0x128] sm:$0xff]
    %v100 = vld [vmem:[#allocation4 + $0x130] sm:$0xff]
    %v101 = vld [vmem:[#allocation4 + $0x138] sm:$0xff]
    %v102 = vld [vmem:[#allocation4 + $0x140] sm:$0xff]
    %v103 = vld [vmem:[#allocation4 + $0x148] sm:$0xff]
    %v104 = vld [vmem:[#allocation4 + $0x150] sm:$0xff]
    %v105 = vld [vmem:[#allocation4 + $0x158] sm:$0xff]
    %v106 = vld [vmem:[#allocation4 + $0x160] sm:$0xff]
    %v107 = vld [vmem:[#allocation4 + $0x168] sm:$0xff]
    %v108 = vld [vmem:[#allocation4 + $0x170] sm:$0xff]
    %v109 = vld [vmem:[#allocation4 + $0x178] sm:$0xff]
    %v110 = vld [vmem:[#allocation4 + $0x180] sm:$0xff]
    %v111 = vld [vmem:[#allocation4 + $0x188] sm:$0xff]
    %v112 = vld [vmem:[#allocation4 + $0x190] sm:$0xff]
    %v113 = vld [vmem:[#allocation4 + $0x198] sm:$0xff]
    %v114 = vld [vmem:[#allocation4 + $0x1a0] sm:$0xff]
    %v115 = vld [vmem:[#allocation4 + $0x1a8] sm:$0xff]
    %v116 = vld [vmem:[#allocation4 + $0x1b0] sm:$0xff]
    %v117 = vld [vmem:[#allocation4 + $0x1b8] sm:$0xff]
    %v118 = vld [vmem:[#allocation4 + $0x1c0] sm:$0xff]
    %v119 = vld [vmem:[#allocation4 + $0x1c8] sm:$0xff]
    %v120 = vld [vmem:[#allocation4 + $0x1d0] sm:$0xff]
    %v121 = vld [vmem:[#allocation4 + $0x1d8] sm:$0xff]
    %v122 = vld [vmem:[#allocation4 + $0x1e0] sm:$0xff]
    %v123 = vld [vmem:[#allocation4 + $0x1e8] sm:$0xff]
    %v124 = vld [vmem:[#allocation4 + $0x1f0] sm:$0xff]
    %v125 = vld [vmem:[#allocation4 + $0x1f8] sm:$0xff]
    %v126 = vld [vmem:[#allocation4 + $0x200] sm:$0xff]
    %v127 = vld [vmem:[#allocation4 + $0x208] sm:$0xff]
    %v128 = vld [vmem:[#allocation4 + $0x210] sm:$0xff]
    %v129 = vld [vmem:[#allocation4 + $0x218] sm:$0xff]
    %v130 = vld [vmem:[#allocation4 + $0x220] sm:$0xff]
    %v131 = vld [vmem:[#allocation4 + $0x228] sm:$0xff]
    %v132 = vld [vmem:[#allocation4 + $0x230] sm:$0xff]
    %v133 = vld [vmem:[#allocation4 + $0x238] sm:$0xff]
    %v134 = vld [vmem:[#allocation4 + $0x240] sm:$0xff]
    %v135 = vld [vmem:[#allocation4 + $0x248] sm:$0xff]
    %v136 = vld [vmem:[#allocation4 + $0x250] sm:$0xff]
    %v137 = vld [vmem:[#allocation4 + $0x258] sm:$0xff]
    %v138 = vld [vmem:[#allocation4 + $0x260] sm:$0xff]
    %v139 = vld [vmem:[#allocation4 + $0x268] sm:$0xff]
    %v140 = vld [vmem:[#allocation4 + $0x270] sm:$0xff]
    %v141 = vld [vmem:[#allocation4 + $0x278] sm:$0xff]
    %v142 = vld [vmem:[#allocation4 + $0x280] sm:$0xff]
    %v143 = vld [vmem:[#allocation4 + $0x288] sm:$0xff]
    %v144 = vld [vmem:[#allocation4 + $0x290] sm:$0xff]
    %v145 = vld [vmem:[#allocation4 + $0x298] sm:$0xff]
    %v146 = vld [vmem:[#allocation4 + $0x2a0] sm:$0xff]
    %v147 = vld [vmem:[#allocation4 + $0x2a8] sm:$0xff]
    %v148 = vld [vmem:[#allocation4 + $0x2b0] sm:$0xff]
    %v149 = vld [vmem:[#allocation4 + $0x2b8] sm:$0xff]
    %v150 = vld [vmem:[#allocation4 + $0x2c0] sm:$0xff]
    %v151 = vld [vmem:[#allocation4 + $0x2c8] sm:$0xff]
    %v152 = vld [vmem:[#allocation4 + $0x2d0] sm:$0xff]
    %v153 = vld [vmem:[#allocation4 + $0x2d8] sm:$0xff]
    %v154 = vld [vmem:[#allocation4 + $0x2e0] sm:$0xff]
    %v155 = vld [vmem:[#allocation4 + $0x2e8] sm:$0xff]
    %v156 = vld [vmem:[#allocation4 + $0x2f0] sm:$0xff]
    %v157 = vld [vmem:[#allocation4 + $0x2f8] sm:$0xff]
    %v158 = vld [vmem:[#allocation4 + $0x300] sm:$0xff]
    %v159 = vld [vmem:[#allocation4 + $0x308] sm:$0xff]
    %v160 = vld [vmem:[#allocation4 + $0x310] sm:$0xff]
    %v161 = vld [vmem:[#allocation4 + $0x318] sm:$0xff]
    %v162 = vld [vmem:[#allocation4 + $0x320] sm:$0xff]
    %v163 = vld [vmem:[#allocation4 + $0x328] sm:$0xff]
    %v164 = vld [vmem:[#allocation4 + $0x330] sm:$0xff]
    %v165 = vld [vmem:[#allocation4 + $0x338] sm:$0xff]
    %v166 = vld [vmem:[#allocation4 + $0x340] sm:$0xff]
    %v167 = vld [vmem:[#allocation4 + $0x348] sm:$0xff]
    %v168 = vld [vmem:[#allocation4 + $0x350] sm:$0xff]
    %v169 = vld [vmem:[#allocation4 + $0x358] sm:$0xff]
    %v170 = vld [vmem:[#allocation4 + $0x360] sm:$0xff]
    %v171 = vld [vmem:[#allocation4 + $0x368] sm:$0xff]
    %v172 = vld [vmem:[#allocation4 + $0x370] sm:$0xff]
    %v173 = vld [vmem:[#allocation4 + $0x378] sm:$0xff]
    %v174 = vld [vmem:[#allocation4 + $0x380] sm:$0xff]
    %v175 = vld [vmem:[#allocation4 + $0x388] sm:$0xff]
    %v176 = vld [vmem:[#allocation4 + $0x390] sm:$0xff]
    %v177 = vld [vmem:[#allocation4 + $0x398] sm:$0xff]
    %v178 = vld [vmem:[#allocation4 + $0x3a0] sm:$0xff]
    %v179 = vld [vmem:[#allocation4 + $0x3a8] sm:$0xff]
    %v180 = vld [vmem:[#allocation4 + $0x3b0] sm:$0xff]
    %v181 = vld [vmem:[#allocation4 + $0x3b8] sm:$0xff]
    %v182 = vld [vmem:[#allocation4 + $0x3c0] sm:$0xff]
    %v183 = vld [vmem:[#allocation4 + $0x3c8] sm:$0xff]
    %v184 = vld [vmem:[#allocation4 + $0x3d0] sm:$0xff]
    %v185 = vld [vmem:[#allocation4 + $0x3d8] sm:$0xff]
    %v186 = vld [vmem:[#allocation4 + $0x3e0] sm:$0xff]
    %v187 = vld [vmem:[#allocation4 + $0x3e8] sm:$0xff]
    %v188 = vld [vmem:[#allocation4 + $0x3f0] sm:$0xff]
    %v189 = vld [vmem:[#allocation4 + $0x3f8] sm:$0xff]
    %v190 = vld [vmem:[#allocation4 + $0x400] sm:$0xff]
    %v191 = vld [vmem:[#allocation4 + $0x408] sm:$0xff]
    %v192 = vld [vmem:[#allocation4 + $0x410] sm:$0xff]
    %v193 = vld [vmem:[#allocation4 + $0x418] sm:$0xff]
    %v194 = vld [vmem:[#allocation4 + $0x420] sm:$0xff]
    %v195 = vld [vmem:[#allocation4 + $0x428] sm:$0xff]
    %v196 = vld [vmem:[#allocation4 + $0x430] sm:$0xff]
    %v197 = vld [vmem:[#allocation4 + $0x438] sm:$0xff]
    %v198 = vld [vmem:[#allocation4 + $0x440] sm:$0xff]
    %v199 = vld [vmem:[#allocation4 + $0x448] sm:$0xff]
    %v200 = vld [vmem:[#allocation4 + $0x450] sm:$0xff]
    %v201 = vld [vmem:[#allocation4 + $0x458] sm:$0xff]
    %v202 = vld [vmem:[#allocation4 + $0x460] sm:$0xff]
    %v203 = vld [vmem:[#allocation4 + $0x468] sm:$0xff]
    %v204 = vld [vmem:[#allocation4 + $0x470] sm:$0xff]
    %v205 = vld [vmem:[#allocation4 + $0x478] sm:$0xff]
    %v206 = vld [vmem:[#allocation4 + $0x480] sm:$0xff]
    %v207 = vld [vmem:[#allocation4 + $0x488] sm:$0xff]
    %v208 = vld [vmem:[#allocation4 + $0x490] sm:$0xff]
    %v209 = vld [vmem:[#allocation4 + $0x498] sm:$0xff]
    %v210 = vld [vmem:[#allocation4 + $0x4a0] sm:$0xff]
    %v211 = vld [vmem:[#allocation4 + $0x4a8] sm:$0xff]
    %v212 = vld [vmem:[#allocation4 + $0x4b0] sm:$0xff]
    %v213 = vld [vmem:[#allocation4 + $0x4b8] sm:$0xff]
    %v214 = vld [vmem:[#allocation4 + $0x4c0] sm:$0xff]
    %v215 = vld [vmem:[#allocation4 + $0x4c8] sm:$0xff]
    %v216 = vld [vmem:[#allocation4 + $0x4d0] sm:$0xff]
    %v217 = vld [vmem:[#allocation4 + $0x4d8] sm:$0xff]
    %v218 = vld [vmem:[#allocation4 + $0x4e0] sm:$0xff]
    %v219 = vld [vmem:[#allocation4 + $0x4e8] sm:$0xff]
    %v220 = vld [vmem:[#allocation4 + $0x4f0] sm:$0xff]
    %v221 = vld [vmem:[#allocation4 + $0x4f8] sm:$0xff]
    %v222 = vld [vmem:[#allocation4 + $0x500] sm:$0xff]
    %v223 = vld [vmem:[#allocation4 + $0x508] sm:$0xff]
    %v224 = vld [vmem:[#allocation4 + $0x510] sm:$0xff]
    %v225 = vld [vmem:[#allocation4 + $0x518] sm:$0xff]
    %v226 = vld [vmem:[#allocation4 + $0x520] sm:$0xff]
    %v227 = vld [vmem:[#allocation4 + $0x528] sm:$0xff]
    %v228 = vld [vmem:[#allocation4 + $0x530] sm:$0xff]
    %v229 = vld [vmem:[#allocation4 + $0x538] sm:$0xff]
    %v230 = vld [vmem:[#allocation4 + $0x540] sm:$0xff]
    %v231 = vld [vmem:[#allocation4 + $0x548] sm:$0xff]
    %v232 = vld [vmem:[#allocation4 + $0x550] sm:$0xff]
    %v233 = vld [vmem:[#allocation4 + $0x558] sm:$0xff]
    %v234 = vld [vmem:[#allocation4 + $0x560] sm:$0xff]
    %v235 = vld [vmem:[#allocation4 + $0x568] sm:$0xff]
    %v236 = vld [vmem:[#allocation4 + $0x570] sm:$0xff]
    %v237 = vld [vmem:[#allocation4 + $0x578] sm:$0xff]
    %v238 = vld [vmem:[#allocation4 + $0x580] sm:$0xff]
    %v239 = vld [vmem:[#allocation4 + $0x588] sm:$0xff]
    %v240 = vld [vmem:[#allocation4 + $0x590] sm:$0xff]
    %v241 = vld [vmem:[#allocation4 + $0x598] sm:$0xff]
    %v242 = vld [vmem:[#allocation4 + $0x5a0] sm:$0xff]
    %v243 = vld [vmem:[#allocation4 + $0x5a8] sm:$0xff]
    %v244 = vld [vmem:[#allocation4 + $0x5b0] sm:$0xff]
    %v245 = vld [vmem:[#allocation4 + $0x5b8] sm:$0xff]
    %v246 = vld [vmem:[#allocation4 + $0x5c0] sm:$0xff]
    %v247 = vld [vmem:[#allocation4 + $0x5c8] sm:$0xff]
    %v248 = vld [vmem:[#allocation4 + $0x5d0] sm:$0xff]
    %v249 = vld [vmem:[#allocation4 + $0x5d8] sm:$0xff]
    %v250 = vld [vmem:[#allocation4 + $0x5e0] sm:$0xff]
    %v251 = vld [vmem:[#allocation4 + $0x5e8] sm:$0xff]
    %v252 = vld [vmem:[#allocation4 + $0x5f0] sm:$0xff]
    %v253 = vld [vmem:[#allocation4 + $0x5f8] sm:$0xff]
    %v254 = vld [vmem:[#allocation4 + $0x600] sm:$0xff]
    %v255 = vld [vmem:[#allocation4 + $0x608] sm:$0xff]
    %v256 = vld [vmem:[#allocation4 + $0x610] sm:$0xff]
    %v257 = vld [vmem:[#allocation4 + $0x618] sm:$0xff]
    %v258 = vld [vmem:[#allocation4 + $0x620] sm:$0xff]
    %v259 = vld [vmem:[#allocation4 + $0x628] sm:$0xff]
    %v260 = vld [vmem:[#allocation4 + $0x630] sm:$0xff]
    %v261 = vld [vmem:[#allocation4 + $0x638] sm:$0xff]
    %v262 = vld [vmem:[#allocation4 + $0x640] sm:$0xff]
    %v263 = vld [vmem:[#allocation4 + $0x648] sm:$0xff]
    %v264 = vld [vmem:[#allocation4 + $0x650] sm:$0xff]
    %v265 = vld [vmem:[#allocation4 + $0x658] sm:$0xff]
    %v266 = vld [vmem:[#allocation4 + $0x660] sm:$0xff]
    %v267 = vld [vmem:[#allocation4 + $0x668] sm:$0xff]
    %v268 = vld [vmem:[#allocation4 + $0x670] sm:$0xff]
    %v269 = vld [vmem:[#allocation4 + $0x678] sm:$0xff]
    %v270 = vld [vmem:[#allocation4 + $0x680] sm:$0xff]
    %v271 = vld [vmem:[#allocation4 + $0x688] sm:$0xff]
    %v272 = vld [vmem:[#allocation4 + $0x690] sm:$0xff]
    %v273 = vld [vmem:[#allocation4 + $0x698] sm:$0xff]
    %v274 = vld [vmem:[#allocation4 + $0x6a0] sm:$0xff]
    %v275 = vld [vmem:[#allocation4 + $0x6a8] sm:$0xff]
    %v276 = vld [vmem:[#allocation4 + $0x6b0] sm:$0xff]
    %v277 = vld [vmem:[#allocation4 + $0x6b8] sm:$0xff]
    %v278 = vld [vmem:[#allocation4 + $0x6c0] sm:$0xff]
    %v279 = vld [vmem:[#allocation4 + $0x6c8] sm:$0xff]
    %v280 = vld [vmem:[#allocation4 + $0x6d0] sm:$0xff]
    %v281 = vld [vmem:[#allocation4 + $0x6d8] sm:$0xff]
    %v282 = vld [vmem:[#allocation4 + $0x6e0] sm:$0xff]
    %v283 = vld [vmem:[#allocation4 + $0x6e8] sm:$0xff]
    %v284 = vld [vmem:[#allocation4 + $0x6f0] sm:$0xff]
    %v285 = vld [vmem:[#allocation4 + $0x6f8] sm:$0xff]
    %v286 = vld [vmem:[#allocation4 + $0x700] sm:$0xff]
    %v287 = vld [vmem:[#allocation4 + $0x708] sm:$0xff]
    %v288 = vld [vmem:[#allocation4 + $0x710] sm:$0xff]
    %v289 = vld [vmem:[#allocation4 + $0x718] sm:$0xff]
    %v290 = vld [vmem:[#allocation4 + $0x720] sm:$0xff]
    %v291 = vld [vmem:[#allocation4 + $0x728] sm:$0xff]
    %v292 = vld [vmem:[#allocation4 + $0x730] sm:$0xff]
    %v293 = vld [vmem:[#allocation4 + $0x738] sm:$0xff]
    %v294 = vld [vmem:[#allocation4 + $0x740] sm:$0xff]
    %v295 = vld [vmem:[#allocation4 + $0x748] sm:$0xff]
    %v296 = vld [vmem:[#allocation4 + $0x750] sm:$0xff]
    %v297 = vld [vmem:[#allocation4 + $0x758] sm:$0xff]
    %v298 = vld [vmem:[#allocation4 + $0x760] sm:$0xff]
    %v299 = vld [vmem:[#allocation4 + $0x768] sm:$0xff]
    %v300 = vld [vmem:[#allocation4 + $0x770] sm:$0xff]
    %v301 = vld [vmem:[#allocation4 + $0x778] sm:$0xff]
    %v302 = vld [vmem:[#allocation4 + $0x780] sm:$0xff]
    %v303 = vld [vmem:[#allocation4 + $0x788] sm:$0xff]
    %v304 = vld [vmem:[#allocation4 + $0x790] sm:$0xff]
    %v305 = vld [vmem:[#allocation4 + $0x798] sm:$0xff]
    %v306 = vld [vmem:[#allocation4 + $0x7a0] sm:$0xff]
    %v307 = vld [vmem:[#allocation4 + $0x7a8] sm:$0xff]
    %v308 = vld [vmem:[#allocation4 + $0x7b0] sm:$0xff]
    %v309 = vld [vmem:[#allocation4 + $0x7b8] sm:$0xff]
    %v310 = vld [vmem:[#allocation4 + $0x7c0] sm:$0xff]
    %v311 = vld [vmem:[#allocation4 + $0x7c8] sm:$0xff]
    %v312 = vld [vmem:[#allocation4 + $0x7d0] sm:$0xff]
    %v313 = vld [vmem:[#allocation4 + $0x7d8] sm:$0xff]
    %v314 = vld [vmem:[#allocation4 + $0x7e0] sm:$0xff]
    %v315 = vld [vmem:[#allocation4 + $0x7e8] sm:$0xff]
    %v316 = vld [vmem:[#allocation4 + $0x7f0] sm:$0xff]
    %v317 = vld [vmem:[#allocation4 + $0x7f8] sm:$0xff]
    %v318 = vld [vmem:[%s2] sm:$0xf]
    %v320 = vperm.slane %v318, 0
    %v321 = vperm.slane %v318, 1
    %v322 = vperm.slane %v318, 2
    %v323 = vperm.slane %v318, 3
    %328 = vmatpush.msra.mxu0 %v122
    %329 = vmatpush.msra.mxu0 %v118
    %330 = vmatpush.msra.mxu0 %v114
    %331 = vmatpush.msra.mxu0 %v110
    %332 = vmatpush.msra.mxu0 %v106
    %333 = vmatpush.msra.mxu0 %v102
    %334 = vmatpush.msra.mxu0 %v98
    %335 = vmatpush.msra.mxu0 %v94
    %336 = vmatpush.msra.mxu0 %v90
    %337 = vmatpush.msra.mxu0 %v86
    %338 = vmatpush.msra.mxu0 %v82
    %339 = vmatpush.msra.mxu0 %v78
    %340 = vmatpush.msra.mxu0 %v74
    %341 = vmatpush.msra.mxu0 %v70
    %342 = vmatpush.msra.mxu0 %v66
    %343 = vmatpush.msra.mxu0 %v62
    %344 = vmatmul.f32.gmra.mxu0 %v46
    %v345 = vpop.f32.mrf.mxu0
    %v346 = vadd.f32 %v320, %v345
    %347 = vmatmul.f32.gmra.mxu0 %v50
    %v348 = vpop.f32.mrf.mxu0
    %v349 = vadd.f32 %v320, %v348
    %350 = vmatmul.f32.gmra.mxu0 %v54
    %v351 = vpop.f32.mrf.mxu0
    %v352 = vadd.f32 %v320, %v351
    %353 = vmatmul.f32.gmra.mxu0 %v58
    %v354 = vpop.f32.mrf.mxu0
    %v355 = vadd.f32 %v320, %v354
    %356 = vdwg.mxu0
    %357 = vmatpush.msra.mxu0 %v186
    %358 = vmatpush.msra.mxu0 %v182
    %359 = vmatpush.msra.mxu0 %v178
    %360 = vmatpush.msra.mxu0 %v174
    %361 = vmatpush.msra.mxu0 %v170
    %362 = vmatpush.msra.mxu0 %v166
    %363 = vmatpush.msra.mxu0 %v162
    %364 = vmatpush.msra.mxu0 %v158
    %365 = vmatpush.msra.mxu0 %v154
    %366 = vmatpush.msra.mxu0 %v150
    %367 = vmatpush.msra.mxu0 %v146
    %368 = vmatpush.msra.mxu0 %v142
    %369 = vmatpush.msra.mxu0 %v138
    %370 = vmatpush.msra.mxu0 %v134
    %371 = vmatpush.msra.mxu0 %v130
    %372 = vmatpush.msra.mxu0 %v126
    %373 = vmatmul.f32.gmra.mxu0 %v47
    %v374 = vpop.f32.mrf.mxu0
    %v375 = vadd.f32 %v346, %v374
    %376 = vmatmul.f32.gmra.mxu0 %v51
    %v377 = vpop.f32.mrf.mxu0
    %v378 = vadd.f32 %v349, %v377
    %379 = vmatmul.f32.gmra.mxu0 %v55
    %v380 = vpop.f32.mrf.mxu0
    %v381 = vadd.f32 %v352, %v380
    %382 = vmatmul.f32.gmra.mxu0 %v59
    %v383 = vpop.f32.mrf.mxu0
    %v384 = vadd.f32 %v355, %v383
    %385 = vdwg.mxu0
    %386 = vmatpush.msra.mxu0 %v250
    %387 = vmatpush.msra.mxu0 %v246
    %388 = vmatpush.msra.mxu0 %v242
    %389 = vmatpush.msra.mxu0 %v238
    %390 = vmatpush.msra.mxu0 %v234
    %391 = vmatpush.msra.mxu0 %v230
    %392 = vmatpush.msra.mxu0 %v226
    %393 = vmatpush.msra.mxu0 %v222
    %394 = vmatpush.msra.mxu0 %v218
    %395 = vmatpush.msra.mxu0 %v214
    %396 = vmatpush.msra.mxu0 %v210
    %397 = vmatpush.msra.mxu0 %v206
    %398 = vmatpush.msra.mxu0 %v202
    %399 = vmatpush.msra.mxu0 %v198
    %400 = vmatpush.msra.mxu0 %v194
    %401 = vmatpush.msra.mxu0 %v190
    %402 = vmatmul.f32.gmra.mxu0 %v48
    %v403 = vpop.f32.mrf.mxu0
    %v404 = vadd.f32 %v375, %v403
    %405 = vmatmul.f32.gmra.mxu0 %v52
    %v406 = vpop.f32.mrf.mxu0
    %v407 = vadd.f32 %v378, %v406
    %408 = vmatmul.f32.gmra.mxu0 %v56
    %v409 = vpop.f32.mrf.mxu0
    %v410 = vadd.f32 %v381, %v409
    %411 = vmatmul.f32.gmra.mxu0 %v60
    %v412 = vpop.f32.mrf.mxu0
    %v413 = vadd.f32 %v384, %v412
    %414 = vdwg.mxu0
    %415 = vmatpush.msra.mxu0 %v314
    %416 = vmatpush.msra.mxu0 %v310
    %417 = vmatpush.msra.mxu0 %v306
    %418 = vmatpush.msra.mxu0 %v302
    %419 = vmatpush.msra.mxu0 %v298
    %420 = vmatpush.msra.mxu0 %v294
    %421 = vmatpush.msra.mxu0 %v290
    %422 = vmatpush.msra.mxu0 %v286
    %423 = vmatpush.msra.mxu0 %v282
    %424 = vmatpush.msra.mxu0 %v278
    %425 = vmatpush.msra.mxu0 %v274
    %426 = vmatpush.msra.mxu0 %v270
    %427 = vmatpush.msra.mxu0 %v266
    %428 = vmatpush.msra.mxu0 %v262
    %429 = vmatpush.msra.mxu0 %v258
    %430 = vmatpush.msra.mxu0 %v254
    %431 = vmatmul.f32.gmra.mxu0 %v49
    %v432 = vpop.f32.mrf.mxu0
    %v433 = vadd.f32 %v404, %v432
    %434 = vmatmul.f32.gmra.mxu0 %v53
    %v435 = vpop.f32.mrf.mxu0
    %v436 = vadd.f32 %v407, %v435
    %437 = vmatmul.f32.gmra.mxu0 %v57
    %v438 = vpop.f32.mrf.mxu0
    %v439 = vadd.f32 %v410, %v438
    %440 = vmatmul.f32.gmra.mxu0 %v61
    %v441 = vpop.f32.mrf.mxu0
    %v442 = vadd.f32 %v413, %v441
    %443 = vdwg.mxu0
    %444 = vmatpush.msra.mxu0 %v123
    %445 = vmatpush.msra.mxu0 %v119
    %446 = vmatpush.msra.mxu0 %v115
    %447 = vmatpush.msra.mxu0 %v111
    %448 = vmatpush.msra.mxu0 %v107
    %449 = vmatpush.msra.mxu0 %v103
    %450 = vmatpush.msra.mxu0 %v99
    %451 = vmatpush.msra.mxu0 %v95
    %452 = vmatpush.msra.mxu0 %v91
    %453 = vmatpush.msra.mxu0 %v87
    %454 = vmatpush.msra.mxu0 %v83
    %455 = vmatpush.msra.mxu0 %v79
    %456 = vmatpush.msra.mxu0 %v75
    %457 = vmatpush.msra.mxu0 %v71
    %458 = vmatpush.msra.mxu0 %v67
    %459 = vmatpush.msra.mxu0 %v63
    %460 = vmatmul.f32.gmra.mxu0 %v46
    %v461 = vpop.f32.mrf.mxu0
    %v462 = vadd.f32 %v321, %v461
    %463 = vmatmul.f32.gmra.mxu0 %v50
    %v464 = vpop.f32.mrf.mxu0
    %v465 = vadd.f32 %v321, %v464
    %466 = vmatmul.f32.gmra.mxu0 %v54
    %v467 = vpop.f32.mrf.mxu0
    %v468 = vadd.f32 %v321, %v467
    %469 = vmatmul.f32.gmra.mxu0 %v58
    %v470 = vpop.f32.mrf.mxu0
    %v471 = vadd.f32 %v321, %v470
    %472 = vdwg.mxu0
    %473 = vmatpush.msra.mxu0 %v187
    %474 = vmatpush.msra.mxu0 %v183
    %475 = vmatpush.msra.mxu0 %v179
    %476 = vmatpush.msra.mxu0 %v175
    %477 = vmatpush.msra.mxu0 %v171
    %478 = vmatpush.msra.mxu0 %v167
    %479 = vmatpush.msra.mxu0 %v163
    %480 = vmatpush.msra.mxu0 %v159
    %481 = vmatpush.msra.mxu0 %v155
    %482 = vmatpush.msra.mxu0 %v151
    %483 = vmatpush.msra.mxu0 %v147
    %484 = vmatpush.msra.mxu0 %v143
    %485 = vmatpush.msra.mxu0 %v139
    %486 = vmatpush.msra.mxu0 %v135
    %487 = vmatpush.msra.mxu0 %v131
    %488 = vmatpush.msra.mxu0 %v127
    %489 = vmatmul.f32.gmra.mxu0 %v47
    %v490 = vpop.f32.mrf.mxu0
    %v491 = vadd.f32 %v462, %v490
    %492 = vmatmul.f32.gmra.mxu0 %v51
    %v493 = vpop.f32.mrf.mxu0
    %v494 = vadd.f32 %v465, %v493
    %495 = vmatmul.f32.gmra.mxu0 %v55
    %v496 = vpop.f32.mrf.mxu0
    %v497 = vadd.f32 %v468, %v496
    %498 = vmatmul.f32.gmra.mxu0 %v59
    %v499 = vpop.f32.mrf.mxu0
    %v500 = vadd.f32 %v471, %v499
    %501 = vdwg.mxu0
    %502 = vmatpush.msra.mxu0 %v251
    %503 = vmatpush.msra.mxu0 %v247
    %504 = vmatpush.msra.mxu0 %v243
    %505 = vmatpush.msra.mxu0 %v239
    %506 = vmatpush.msra.mxu0 %v235
    %507 = vmatpush.msra.mxu0 %v231
    %508 = vmatpush.msra.mxu0 %v227
    %509 = vmatpush.msra.mxu0 %v223
    %510 = vmatpush.msra.mxu0 %v219
    %511 = vmatpush.msra.mxu0 %v215
    %512 = vmatpush.msra.mxu0 %v211
    %513 = vmatpush.msra.mxu0 %v207
    %514 = vmatpush.msra.mxu0 %v203
    %515 = vmatpush.msra.mxu0 %v199
    %516 = vmatpush.msra.mxu0 %v195
    %517 = vmatpush.msra.mxu0 %v191
    %518 = vmatmul.f32.gmra.mxu0 %v48
    %v519 = vpop.f32.mrf.mxu0
    %v520 = vadd.f32 %v491, %v519
    %521 = vmatmul.f32.gmra.mxu0 %v52
    %v522 = vpop.f32.mrf.mxu0
    %v523 = vadd.f32 %v494, %v522
    %524 = vmatmul.f32.gmra.mxu0 %v56
    %v525 = vpop.f32.mrf.mxu0
    %v526 = vadd.f32 %v497, %v525
    %527 = vmatmul.f32.gmra.mxu0 %v60
    %v528 = vpop.f32.mrf.mxu0
    %v529 = vadd.f32 %v500, %v528
    %530 = vdwg.mxu0
    %531 = vmatpush.msra.mxu0 %v315
    %532 = vmatpush.msra.mxu0 %v311
    %533 = vmatpush.msra.mxu0 %v307
    %534 = vmatpush.msra.mxu0 %v303
    %535 = vmatpush.msra.mxu0 %v299
    %536 = vmatpush.msra.mxu0 %v295
    %537 = vmatpush.msra.mxu0 %v291
    %538 = vmatpush.msra.mxu0 %v287
    %539 = vmatpush.msra.mxu0 %v283
    %540 = vmatpush.msra.mxu0 %v279
    %541 = vmatpush.msra.mxu0 %v275
    %542 = vmatpush.msra.mxu0 %v271
    %543 = vmatpush.msra.mxu0 %v267
    %544 = vmatpush.msra.mxu0 %v263
    %545 = vmatpush.msra.mxu0 %v259
    %546 = vmatpush.msra.mxu0 %v255
    %547 = vmatmul.f32.gmra.mxu0 %v49
    %v548 = vpop.f32.mrf.mxu0
    %v549 = vadd.f32 %v520, %v548
    %550 = vmatmul.f32.gmra.mxu0 %v53
    %v551 = vpop.f32.mrf.mxu0
    %v552 = vadd.f32 %v523, %v551
    %553 = vmatmul.f32.gmra.mxu0 %v57
    %v554 = vpop.f32.mrf.mxu0
    %v555 = vadd.f32 %v526, %v554
    %556 = vmatmul.f32.gmra.mxu0 %v61
    %v557 = vpop.f32.mrf.mxu0
    %v558 = vadd.f32 %v529, %v557
    %559 = vdwg.mxu0
    %560 = vmatpush.msra.mxu0 %v124
    %561 = vmatpush.msra.mxu0 %v120
    %562 = vmatpush.msra.mxu0 %v116
    %563 = vmatpush.msra.mxu0 %v112
    %564 = vmatpush.msra.mxu0 %v108
    %565 = vmatpush.msra.mxu0 %v104
    %566 = vmatpush.msra.mxu0 %v100
    %567 = vmatpush.msra.mxu0 %v96
    %568 = vmatpush.msra.mxu0 %v92
    %569 = vmatpush.msra.mxu0 %v88
    %570 = vmatpush.msra.mxu0 %v84
    %571 = vmatpush.msra.mxu0 %v80
    %572 = vmatpush.msra.mxu0 %v76
    %573 = vmatpush.msra.mxu0 %v72
    %574 = vmatpush.msra.mxu0 %v68
    %575 = vmatpush.msra.mxu0 %v64
    %576 = vmatmul.f32.gmra.mxu0 %v46
    %v577 = vpop.f32.mrf.mxu0
    %v578 = vadd.f32 %v322, %v577
    %579 = vmatmul.f32.gmra.mxu0 %v50
    %v580 = vpop.f32.mrf.mxu0
    %v581 = vadd.f32 %v322, %v580
    %582 = vmatmul.f32.gmra.mxu0 %v54
    %v583 = vpop.f32.mrf.mxu0
    %v584 = vadd.f32 %v322, %v583
    %585 = vmatmul.f32.gmra.mxu0 %v58
    %v586 = vpop.f32.mrf.mxu0
    %v587 = vadd.f32 %v322, %v586
    %588 = vdwg.mxu0
    %589 = vmatpush.msra.mxu0 %v188
    %590 = vmatpush.msra.mxu0 %v184
    %591 = vmatpush.msra.mxu0 %v180
    %592 = vmatpush.msra.mxu0 %v176
    %593 = vmatpush.msra.mxu0 %v172
    %594 = vmatpush.msra.mxu0 %v168
    %595 = vmatpush.msra.mxu0 %v164
    %596 = vmatpush.msra.mxu0 %v160
    %597 = vmatpush.msra.mxu0 %v156
    %598 = vmatpush.msra.mxu0 %v152
    %599 = vmatpush.msra.mxu0 %v148
    %600 = vmatpush.msra.mxu0 %v144
    %601 = vmatpush.msra.mxu0 %v140
    %602 = vmatpush.msra.mxu0 %v136
    %603 = vmatpush.msra.mxu0 %v132
    %604 = vmatpush.msra.mxu0 %v128
    %605 = vmatmul.f32.gmra.mxu0 %v47
    %v606 = vpop.f32.mrf.mxu0
    %v607 = vadd.f32 %v578, %v606
    %608 = vmatmul.f32.gmra.mxu0 %v51
    %v609 = vpop.f32.mrf.mxu0
    %v610 = vadd.f32 %v581, %v609
    %611 = vmatmul.f32.gmra.mxu0 %v55
    %v612 = vpop.f32.mrf.mxu0
    %v613 = vadd.f32 %v584, %v612
    %614 = vmatmul.f32.gmra.mxu0 %v59
    %v615 = vpop.f32.mrf.mxu0
    %v616 = vadd.f32 %v587, %v615
    %617 = vdwg.mxu0
    %618 = vmatpush.msra.mxu0 %v252
    %619 = vmatpush.msra.mxu0 %v248
    %620 = vmatpush.msra.mxu0 %v244
    %621 = vmatpush.msra.mxu0 %v240
    %622 = vmatpush.msra.mxu0 %v236
    %623 = vmatpush.msra.mxu0 %v232
    %624 = vmatpush.msra.mxu0 %v228
    %625 = vmatpush.msra.mxu0 %v224
    %626 = vmatpush.msra.mxu0 %v220
    %627 = vmatpush.msra.mxu0 %v216
    %628 = vmatpush.msra.mxu0 %v212
    %629 = vmatpush.msra.mxu0 %v208
    %630 = vmatpush.msra.mxu0 %v204
    %631 = vmatpush.msra.mxu0 %v200
    %632 = vmatpush.msra.mxu0 %v196
    %633 = vmatpush.msra.mxu0 %v192
    %634 = vmatmul.f32.gmra.mxu0 %v48
    %v635 = vpop.f32.mrf.mxu0
    %v636 = vadd.f32 %v607, %v635
    %637 = vmatmul.f32.gmra.mxu0 %v52
    %v638 = vpop.f32.mrf.mxu0
    %v639 = vadd.f32 %v610, %v638
    %640 = vmatmul.f32.gmra.mxu0 %v56
    %v641 = vpop.f32.mrf.mxu0
    %v642 = vadd.f32 %v613, %v641
    %643 = vmatmul.f32.gmra.mxu0 %v60
    %v644 = vpop.f32.mrf.mxu0
    %v645 = vadd.f32 %v616, %v644
    %646 = vdwg.mxu0
    %647 = vmatpush.msra.mxu0 %v316
    %648 = vmatpush.msra.mxu0 %v312
    %649 = vmatpush.msra.mxu0 %v308
    %650 = vmatpush.msra.mxu0 %v304
    %651 = vmatpush.msra.mxu0 %v300
    %652 = vmatpush.msra.mxu0 %v296
    %653 = vmatpush.msra.mxu0 %v292
    %654 = vmatpush.msra.mxu0 %v288
    %655 = vmatpush.msra.mxu0 %v284
    %656 = vmatpush.msra.mxu0 %v280
    %657 = vmatpush.msra.mxu0 %v276
    %658 = vmatpush.msra.mxu0 %v272
    %659 = vmatpush.msra.mxu0 %v268
    %660 = vmatpush.msra.mxu0 %v264
    %661 = vmatpush.msra.mxu0 %v260
    %662 = vmatpush.msra.mxu0 %v256
    %663 = vmatmul.f32.gmra.mxu0 %v49
    %v664 = vpop.f32.mrf.mxu0
    %v665 = vadd.f32 %v636, %v664
    %666 = vmatmul.f32.gmra.mxu0 %v53
    %v667 = vpop.f32.mrf.mxu0
    %v668 = vadd.f32 %v639, %v667
    %669 = vmatmul.f32.gmra.mxu0 %v57
    %v670 = vpop.f32.mrf.mxu0
    %v671 = vadd.f32 %v642, %v670
    %672 = vmatmul.f32.gmra.mxu0 %v61
    %v673 = vpop.f32.mrf.mxu0
    %v674 = vadd.f32 %v645, %v673
    %675 = vdwg.mxu0
    %676 = vmatpush.msra.mxu0 %v125
    %677 = vmatpush.msra.mxu0 %v121
    %678 = vmatpush.msra.mxu0 %v117
    %679 = vmatpush.msra.mxu0 %v113
    %680 = vmatpush.msra.mxu0 %v109
    %681 = vmatpush.msra.mxu0 %v105
    %682 = vmatpush.msra.mxu0 %v101
    %683 = vmatpush.msra.mxu0 %v97
    %684 = vmatpush.msra.mxu0 %v93
    %685 = vmatpush.msra.mxu0 %v89
    %686 = vmatpush.msra.mxu0 %v85
    %687 = vmatpush.msra.mxu0 %v81
    %688 = vmatpush.msra.mxu0 %v77
    %689 = vmatpush.msra.mxu0 %v73
    %690 = vmatpush.msra.mxu0 %v69
    %691 = vmatpush.msra.mxu0 %v65
    %692 = vmatmul.f32.gmra.mxu0 %v46
    %v693 = vpop.f32.mrf.mxu0
    %v694 = vadd.f32 %v323, %v693
    %695 = vmatmul.f32.gmra.mxu0 %v50
    %v696 = vpop.f32.mrf.mxu0
    %v697 = vadd.f32 %v323, %v696
    %698 = vmatmul.f32.gmra.mxu0 %v54
    %v699 = vpop.f32.mrf.mxu0
    %v700 = vadd.f32 %v323, %v699
    %701 = vmatmul.f32.gmra.mxu0 %v58
    %v702 = vpop.f32.mrf.mxu0
    %v703 = vadd.f32 %v323, %v702
    %704 = vdwg.mxu0
    %705 = vmatpush.msra.mxu0 %v189
    %706 = vmatpush.msra.mxu0 %v185
    %707 = vmatpush.msra.mxu0 %v181
    %708 = vmatpush.msra.mxu0 %v177
    %709 = vmatpush.msra.mxu0 %v173
    %710 = vmatpush.msra.mxu0 %v169
    %711 = vmatpush.msra.mxu0 %v165
    %712 = vmatpush.msra.mxu0 %v161
    %713 = vmatpush.msra.mxu0 %v157
    %714 = vmatpush.msra.mxu0 %v153
    %715 = vmatpush.msra.mxu0 %v149
    %716 = vmatpush.msra.mxu0 %v145
    %717 = vmatpush.msra.mxu0 %v141
    %718 = vmatpush.msra.mxu0 %v137
    %719 = vmatpush.msra.mxu0 %v133
    %720 = vmatpush.msra.mxu0 %v129
    %721 = vmatmul.f32.gmra.mxu0 %v47
    %v722 = vpop.f32.mrf.mxu0
    %v723 = vadd.f32 %v694, %v722
    %724 = vmatmul.f32.gmra.mxu0 %v51
    %v725 = vpop.f32.mrf.mxu0
    %v726 = vadd.f32 %v697, %v725
    %727 = vmatmul.f32.gmra.mxu0 %v55
    %v728 = vpop.f32.mrf.mxu0
    %v729 = vadd.f32 %v700, %v728
    %730 = vmatmul.f32.gmra.mxu0 %v59
    %v731 = vpop.f32.mrf.mxu0
    %v732 = vadd.f32 %v703, %v731
    %733 = vdwg.mxu0
    %734 = vmatpush.msra.mxu0 %v253
    %735 = vmatpush.msra.mxu0 %v249
    %736 = vmatpush.msra.mxu0 %v245
    %737 = vmatpush.msra.mxu0 %v241
    %738 = vmatpush.msra.mxu0 %v237
    %739 = vmatpush.msra.mxu0 %v233
    %740 = vmatpush.msra.mxu0 %v229
    %741 = vmatpush.msra.mxu0 %v225
    %742 = vmatpush.msra.mxu0 %v221
    %743 = vmatpush.msra.mxu0 %v217
    %744 = vmatpush.msra.mxu0 %v213
    %745 = vmatpush.msra.mxu0 %v209
    %746 = vmatpush.msra.mxu0 %v205
    %747 = vmatpush.msra.mxu0 %v201
    %748 = vmatpush.msra.mxu0 %v197
    %749 = vmatpush.msra.mxu0 %v193
    %750 = vmatmul.f32.gmra.mxu0 %v48
    %v751 = vpop.f32.mrf.mxu0
    %v752 = vadd.f32 %v723, %v751
    %753 = vmatmul.f32.gmra.mxu0 %v52
    %v754 = vpop.f32.mrf.mxu0
    %v755 = vadd.f32 %v726, %v754
    %756 = vmatmul.f32.gmra.mxu0 %v56
    %v757 = vpop.f32.mrf.mxu0
    %v758 = vadd.f32 %v729, %v757
    %759 = vmatmul.f32.gmra.mxu0 %v60
    %v760 = vpop.f32.mrf.mxu0
    %v761 = vadd.f32 %v732, %v760
    %762 = vdwg.mxu0
    %763 = vmatpush.msra.mxu0 %v317
    %764 = vmatpush.msra.mxu0 %v313
    %765 = vmatpush.msra.mxu0 %v309
    %766 = vmatpush.msra.mxu0 %v305
    %767 = vmatpush.msra.mxu0 %v301
    %768 = vmatpush.msra.mxu0 %v297
    %769 = vmatpush.msra.mxu0 %v293
    %770 = vmatpush.msra.mxu0 %v289
    %771 = vmatpush.msra.mxu0 %v285
    %772 = vmatpush.msra.mxu0 %v281
    %773 = vmatpush.msra.mxu0 %v277
    %774 = vmatpush.msra.mxu0 %v273
    %775 = vmatpush.msra.mxu0 %v269
    %776 = vmatpush.msra.mxu0 %v265
    %777 = vmatpush.msra.mxu0 %v261
    %778 = vmatpush.msra.mxu0 %v257
    %779 = vmatmul.f32.gmra.mxu0 %v49
    %v780 = vpop.f32.mrf.mxu0
    %v781 = vadd.f32 %v752, %v780
    %782 = vmatmul.f32.gmra.mxu0 %v53
    %v783 = vpop.f32.mrf.mxu0
    %v784 = vadd.f32 %v755, %v783
    %785 = vmatmul.f32.gmra.mxu0 %v57
    %v786 = vpop.f32.mrf.mxu0
    %v787 = vadd.f32 %v758, %v786
    %788 = vmatmul.f32.gmra.mxu0 %v61
    %v789 = vpop.f32.mrf.mxu0
    %v790 = vadd.f32 %v761, %v789
    %791 = vdwg.mxu0
    %792 = vst [vmem:[%s3] sm:$0xff] %v433
    %793 = vst [vmem:[%s3 + $0x8] sm:$0xff] %v549
    %794 = vst [vmem:[%s3 + $0x10] sm:$0xff] %v665
    %795 = vst [vmem:[%s3 + $0x18] sm:$0xff] %v781
    %796 = vst [vmem:[%s3 + $0x20] sm:$0xff] %v436
    %797 = vst [vmem:[%s3 + $0x28] sm:$0xff] %v552
    %798 = vst [vmem:[%s3 + $0x30] sm:$0xff] %v668
    %799 = vst [vmem:[%s3 + $0x38] sm:$0xff] %v784
    %800 = vst [vmem:[%s3 + $0x40] sm:$0xff] %v439
    %801 = vst [vmem:[%s3 + $0x48] sm:$0xff] %v555
    %802 = vst [vmem:[%s3 + $0x50] sm:$0xff] %v671
    %803 = vst [vmem:[%s3 + $0x58] sm:$0xff] %v787
    %804 = vst [vmem:[%s3 + $0x60] sm:$0xff] %v442
    %805 = vst [vmem:[%s3 + $0x68] sm:$0xff] %v558
    %806 = vst [vmem:[%s3 + $0x70] sm:$0xff] %v674
    %807 = vst [vmem:[%s3 + $0x78] sm:$0xff] %v790
    // Predicated region
    $region22: #{multihead2_forward.6} parent=1 // pred_check
      _
    $region23: #{multihead2_forward.6} parent=1 // pred_check_branch
      %809 = sbr.rel (0) target = $region25
    $region24: #{multihead2_forward.6} parent=1 // pred_region
      _
    $region25: #{multihead2_forward.6} parent=1 // pred_fallthru
      _
    // Predicated region
    $region26: #{multihead2_forward.6} parent=1 // pred_check
      _
    $region27: #{multihead2_forward.6} parent=1 // pred_check_branch
      %811 = sbr.rel (0) target = $region29
    $region28: #{multihead2_forward.6} parent=1 // pred_region
      _
    $region29: #{multihead2_forward.6} parent=1 // pred_fallthru
      _
    %812 = vsyncpa [#allocation3], 1
    %813 = vsyncpa [#allocation5], 1

</llo_original>
